<compile_context>
chip_gen: v5e
topology: v5e:2x2
jax: 0.10.0
libtpu: 0.0.40
codegen_flags: <defaults>
</compile_context>

<pallas_src>
import functools

import numpy as np
import jax
import jax.numpy as jnp
from jax import lax
from jax.experimental import pallas as pl
from jax.experimental.pallas import tpu as pltpu

BN_EPS = 1e-5
LANE = 128
VMEM_LIMIT_BYTES = 32 * 1024 * 1024   # explicit; safe on v5e/v6e (128 MiB) and v7x (64 MiB)
VMEM_TILE_BUDGET = 12 * 1024 * 1024   # target for the double-buffered per-tile working set


def _round_up(x, m):
    return (x + m - 1) // m * m


def _pick_tile_m(m_rows, k_pack, c_pad, in_itemsize, budget=VMEM_TILE_BUDGET):
    """Pick the M-tile.  Small problems collapse to a single tile (grid=(1,));
    otherwise take the largest tile whose double-buffered working set (patch
    tile + f32 output tile + weight) fits the VMEM budget.  M is padded UP to
    a multiple of the tile, so awkward M no longer degrades to 128-row tiles."""
    def ws(t):
        return (2 * t * (k_pack * in_itemsize + c_pad * 4 + 8)
                + 4 * k_pack * c_pad * in_itemsize)
    full = _round_up(max(m_rows, 8), 8)
    if ws(full) <= budget:
        return full                          # whole problem in one grid step
    for t in (2048, 1024, 512, 256):
        if ws(t) <= budget:
            return t
    return 128


def _stats_kernel(p_ref, w_ref, oh_ref, ow_ref, rh_ref, rw_ref, sums_ref, *,
                  h_out, w_out):
    """Phase 1: per-tile partial sum / sum-of-squares of the packed sub-pixel
    transposed conv, masked so padded rows and out-of-range boundary phases
    are excluded.  Each grid step writes its OWN partial block (no shared
    accumulator), so the grid axis is 'parallel' and megacore-safe on v7x."""
    y = jnp.dot(p_ref[...], w_ref[...], preferred_element_type=jnp.float32)

    # unsigned-range trick: 0 <= v < n  <=>  bitcast(v, u32) < n.
    # Padded rows carry a large negative base -> huge u32 -> always invalid.
    oh = pltpu.bitcast(oh_ref[...] + rh_ref[...], jnp.uint32)   # (T,1)+(1,C) -> (T,C)
    ow = pltpu.bitcast(ow_ref[...] + rw_ref[...], jnp.uint32)
    valid = (oh < jnp.uint32(h_out)) & (ow < jnp.uint32(w_out))
    ym = jnp.where(valid, y, 0.0)

    sums_ref[0, 0:1, :] = jnp.sum(ym, axis=0, keepdims=True)
    sums_ref[0, 1:2, :] = jnp.sum(ym * ym, axis=0, keepdims=True)


def _apply_kernel(p_ref, w_ref, scale_ref, shift_ref, o_ref):
    """Phase 2: recompute the cheap matmul, fold BN (per-lane scale/shift) and
    ReLU, store a fully lane-dense f32 tile."""
    y = jnp.dot(p_ref[...], w_ref[...], preferred_element_type=jnp.float32)
    o_ref[...] = jnp.maximum(y * scale_ref[...] + shift_ref[...], 0.0
                             ).astype(o_ref.dtype)


def basic_deconv2d(x, weight, gamma, beta, *, stride, padding,
                   eps=BN_EPS, mxu_dtype=jnp.bfloat16):
    """Fused ConvTranspose2d(bias=False) + BatchNorm2d(train batch stats) + ReLU.

    x: (N, C_in, H, W) NCHW.  weight: (C_in, C_out, kH, kW) (PyTorch layout).
    Returns NCHW float32, matching the PyTorch module's forward.
    """
    N, C_in, H_in, W_in = x.shape
    C_in_w, C_out, kH, kW = weight.shape
    assert C_in == C_in_w
    s, p = stride, padding
    H_out = (H_in - 1) * s - 2 * p + kH
    W_out = (W_in - 1) * s - 2 * p + kW

    # ---- sub-pixel decomposition geometry --------------------------------
    # For output o:  t = (o + p) // s, phase r = (o + p) % s,
    #   y[o] = sum_j x[t - j] * W[kh = r + j*s]   (j = 0..T-1, T = ceil(k/s))
    T_h, T_w = -(-kH // s), -(-kW // s)
    Th = (H_out - 1 + p) // s + 1            # number of t_h positions
    Tw = (W_out - 1 + p) // s + 1            # number of t_w positions
    K = T_h * T_w * C_in                     # zero-free contraction / position
    C_sub = s * s * C_out                    # phase-expanded channels / position

    # ---- lane packing: G adjacent t_w positions share the 128 lanes -------
    G = max(1, min(LANE // C_sub, 8)) if C_sub >= 1 else 1
    Tw_p = _round_up(Tw, G)
    Tw_g = Tw_p // G
    K_pack = G * K                           # block-diagonal contraction size
    C_pack = G * C_sub                       # real lanes
    C_pad = _round_up(C_pack, LANE)          # lane-dense output width

    # ---- patch build (plain JAX glue; no zero-dilated im2col) -------------
    x_nhwc = jnp.transpose(x, (0, 2, 3, 1))
    xp = jnp.pad(x_nhwc, ((0, 0),
                          (T_h - 1, max(0, Th - H_in)),
                          (T_w - 1, max(0, Tw_p - W_in)),
                          (0, 0)))
    cols = []
    for d_h in range(T_h):
        for d_w in range(T_w):
            cols.append(xp[:, d_h:d_h + Th, d_w:d_w + Tw_p, :])
    patches = jnp.stack(cols, axis=3)                   # (N, Th, Tw_p, T_h*T_w, C_in)
    # rows (n, t_h, t_w_group); columns (g, d_h, d_w, ci)
    patches = patches.reshape(N * Th * Tw_g, K_pack)

    # sub-pixel weight: row (d_h, d_w, ci), column (r_h, r_w, co)
    w_sub = jnp.zeros((T_h, T_w, C_in, s, s, C_out), weight.dtype)
    for d_h in range(T_h):
        for d_w in range(T_w):
            for r_h in range(s):
                kh = r_h + (T_h - 1 - d_h) * s
                if kh >= kH:
                    continue
                for r_w in range(s):
                    kw = r_w + (T_w - 1 - d_w) * s
                    if kw >= kW:
                        continue
                    w_sub = w_sub.at[d_h, d_w, :, r_h, r_w, :].set(weight[:, :, kh, kw])
    w_mat = w_sub.reshape(K, C_sub)
    # block-diagonal packed weight (G*K, G*C_sub); lanes ordered (g, r_h, r_w, co)
    w_pack = jnp.kron(jnp.eye(G, dtype=w_mat.dtype), w_mat)
    w_pack = jnp.pad(w_pack, ((0, 0), (0, C_pad - C_pack))).astype(mxu_dtype)

    # ---- tiling: pad M up to a multiple of the chosen tile ----------------
    M_rows = N * Th * Tw_g
    tile_m = _pick_tile_m(M_rows, K_pack, C_pad, np.dtype(mxu_dtype).itemsize)
    M_pad = _round_up(M_rows, tile_m)
    grid_m = M_pad // tile_m
    patches = jnp.pad(patches, ((0, M_pad - M_rows), (0, 0))).astype(mxu_dtype)

    # per-row output-index bases / per-lane phase offsets for the stats mask
    big = jnp.int32(2 ** 20)
    rows = jnp.arange(M_pad, dtype=jnp.int32)
    rem = rows % (Th * Tw_g)
    row_oh = jnp.where(rows < M_rows, (rem // Tw_g) * s - p, -big)
    row_ow = jnp.where(rows < M_rows, (rem % Tw_g) * (G * s) - p, -big)
    row_oh = row_oh.astype(jnp.int32).reshape(M_pad, 1)
    row_ow = row_ow.astype(jnp.int32).reshape(M_pad, 1)
    cidx = jnp.arange(C_pad, dtype=jnp.int32)
    g_i = cidx // C_sub
    rem_c = cidx % C_sub
    col_rh = jnp.where(cidx < C_pack, rem_c // (s * C_out), 0)
    col_rw = jnp.where(cidx < C_pack, g_i * s + (rem_c // C_out) % s, 0)
    col_rh = col_rh.astype(jnp.int32).reshape(1, C_pad)
    col_rw = col_rw.astype(jnp.int32).reshape(1, C_pad)

    # ---- phase 1: global BN statistics via per-tile partials --------------
    partial = pl.pallas_call(
        functools.partial(_stats_kernel, h_out=H_out, w_out=W_out),
        out_shape=jax.ShapeDtypeStruct((grid_m, 2, C_pad), jnp.float32),
        grid=(grid_m,),
        in_specs=[
            pl.BlockSpec((tile_m, K_pack), lambda i: (i, 0)),
            pl.BlockSpec((K_pack, C_pad), lambda i: (0, 0)),
            pl.BlockSpec((tile_m, 1), lambda i: (i, 0)),
            pl.BlockSpec((tile_m, 1), lambda i: (i, 0)),
            pl.BlockSpec((1, C_pad), lambda i: (0, 0)),
            pl.BlockSpec((1, C_pad), lambda i: (0, 0)),
        ],
        out_specs=pl.BlockSpec((1, 2, C_pad), lambda i: (i, 0, 0)),
        compiler_params=pltpu.CompilerParams(
            dimension_semantics=("parallel",),   # per-tile partials: no accumulation race
            vmem_limit_bytes=VMEM_LIMIT_BYTES),
    )(patches, w_pack, row_oh, row_ow, col_rh, col_rw)

    # fold phase/group lanes back onto true channels (tiny O(C) work in JAX)
    sums = jnp.sum(partial, axis=0)                       # (2, C_pad)
    count = jnp.float32(N * H_out * W_out)
    sum1 = sums[0, :C_pack].reshape(G * s * s, C_out).sum(axis=0)
    sum2 = sums[1, :C_pack].reshape(G * s * s, C_out).sum(axis=0)
    mean = sum1 / count
    # NOTE: single-pass E[x^2]-E[x]^2 in f32; fine at these activation scales,
    # switch to a shifted / two-pass variant if activations can be very large.
    var = sum2 / count - mean * mean                      # biased, as BN training uses
    inv = lax.rsqrt(var + eps)
    scale_c = gamma.astype(jnp.float32) * inv
    shift_c = beta.astype(jnp.float32) - mean * scale_c
    co_idx = jnp.arange(C_pad) % C_out                    # tile per-channel onto lanes
    scale = scale_c[co_idx].reshape(1, C_pad)
    shift = shift_c[co_idx].reshape(1, C_pad)

    # ---- phase 2: normalize + ReLU (recompute the cheap matmul) -----------
    # TODO(synk): for tiny problems both passes could be fused into a single
    # pallas_call (fold the per-channel stats on-chip) to drop one call
    # overhead; kept as two calls so the stats pass stays megacore-parallel.
    out_mat = pl.pallas_call(
        _apply_kernel,
        out_shape=jax.ShapeDtypeStruct((M_pad, C_pad), jnp.float32),
        grid=(grid_m,),
        in_specs=[
            pl.BlockSpec((tile_m, K_pack), lambda i: (i, 0)),
            pl.BlockSpec((K_pack, C_pad), lambda i: (0, 0)),
            pl.BlockSpec((1, C_pad), lambda i: (0, 0)),
            pl.BlockSpec((1, C_pad), lambda i: (0, 0)),
        ],
        out_specs=pl.BlockSpec((tile_m, C_pad), lambda i: (i, 0)),
        compiler_params=pltpu.CompilerParams(
            dimension_semantics=("parallel",),    # independent tiles (v7x 2 TCs)
            vmem_limit_bytes=VMEM_LIMIT_BYTES),
    )(patches, w_pack, scale, shift)

    # ---- epilogue: ONE transpose folds pixel-shuffle + NCHW layout ---------
    # TODO(synk): keep NHWC end-to-end if the surrounding model allows; NCHW
    # here only to match the PyTorch module's output layout.
    y = out_mat[:M_rows, :C_pack].reshape(N, Th, Tw_g, G, s, s, C_out)
    y = y.transpose(0, 6, 1, 4, 2, 3, 5).reshape(N, C_out, Th * s, Tw_g * G * s)
    return y[:, :, p:p + H_out, p:p + W_out]


def reference(x, weight, gamma, beta, *, stride, padding,
              eps=BN_EPS, mxu_dtype=jnp.bfloat16):
    """Pure-JAX reference (lax dilated conv).  Inputs are cast to the same MXU
    dtype so the check isolates the decomposition / BN structure (the bf16
    input rounding is identical on both sides, accumulation is f32)."""
    kH, kW = weight.shape[2], weight.shape[3]
    w_flip = jnp.flip(weight, (2, 3)).transpose(1, 0, 2, 3)   # (C_out, C_in, kH, kW)
    y = lax.conv_general_dilated(
        x.astype(mxu_dtype), w_flip.astype(mxu_dtype),
        window_strides=(1, 1),
        padding=[(kH - 1 - padding, kH - 1 - padding),
                 (kW - 1 - padding, kW - 1 - padding)],
        lhs_dilation=(stride, stride),
        dimension_numbers=('NCHW', 'OIHW', 'NCHW'),
        preferred_element_type=jnp.float32)
    mean = y.mean(axis=(0, 2, 3), keepdims=True)
    var = ((y - mean) ** 2).mean(axis=(0, 2, 3), keepdims=True)
    y_hat = (y - mean) * lax.rsqrt(var + eps) \
        * gamma.reshape(1, -1, 1, 1) + beta.reshape(1, -1, 1, 1)
    return jnp.maximum(y_hat, 0.0)


if __name__ == "__main__":
    key = jax.random.PRNGKey(0)
    k_x, k_w = jax.random.split(key)

    # module config: BasicDeconv2d(4, 8, kernel_size=4, stride=2, padding=1, bias=False)
    N, C_in, H_in, W_in = 2, 4, 16, 16
    C_out, ksz, stride, padding = 8, 4, 2, 1

    x = jax.random.normal(k_x, (N, C_in, H_in, W_in), jnp.float32)
    bound = 1.0 / (C_out * ksz * ksz) ** 0.5
    weight = jax.random.uniform(k_w, (C_in, C_out, ksz, ksz), jnp.float32, -bound, bound)
    gamma = jnp.ones((C_out,), jnp.float32)
    beta = jnp.zeros((C_out,), jnp.float32)

    fwd = jax.jit(functools.partial(basic_deconv2d, stride=stride, padding=padding))
    out = jax.block_until_ready(fwd(x, weight, gamma, beta))

    H_out = (H_in - 1) * stride - 2 * padding + ksz
    assert out.shape == (N, C_out, H_out, H_out), out.shape

    ref = reference(x, weight, gamma, beta, stride=stride, padding=padding)
    max_err = float(jnp.max(jnp.abs(out - ref)))
    assert jnp.allclose(out, ref, rtol=2e-3, atol=2e-3), max_err
    print("KERNEL_OK")
</pallas_src>

<mosaic_0001>
module attributes {stable_mosaic.version = 11 : i64} {
  func.func @_stats_kernel(%arg0: i32, %arg1: memref<176x64xbf16, #tpu.memory_space<vmem>>, %arg2: memref<64x128xbf16, #tpu.memory_space<vmem>>, %arg3: memref<176x1xi32, #tpu.memory_space<vmem>>, %arg4: memref<176x1xi32, #tpu.memory_space<vmem>>, %arg5: memref<1x128xi32, #tpu.memory_space<vmem>>, %arg6: memref<1x128xi32, #tpu.memory_space<vmem>>, %arg7: memref<1x2x128xf32, #tpu.memory_space<vmem>>) attributes {dimension_semantics = [#tpu.dimension_semantics<parallel>], iteration_bounds = array<i64: 1>, scalar_prefetch = 0 : i64, scratch_operands = 0 : i64, tpu.core_type = #tpu.core_type<tc>, window_params = [{transform_indices = @transform_0, window_bounds = array<i64: 176, 64>}, {pipeline_mode = #tpu.pipeline_mode<synchronous>, transform_indices = @transform_1, window_bounds = array<i64: 64, 128>}, {transform_indices = @transform_2, window_bounds = array<i64: 176, 1>}, {transform_indices = @transform_3, window_bounds = array<i64: 176, 1>}, {pipeline_mode = #tpu.pipeline_mode<synchronous>, transform_indices = @transform_4, window_bounds = array<i64: 1, 128>}, {pipeline_mode = #tpu.pipeline_mode<synchronous>, transform_indices = @transform_5, window_bounds = array<i64: 1, 128>}, {transform_indices = @transform_6, window_bounds = array<i64: 1, 2, 128>}]} {
    %c0 = arith.constant 0 : index
    %c0_0 = arith.constant 0 : index
    %0 = vector.load %arg1[%c0, %c0_0] : memref<176x64xbf16, #tpu.memory_space<vmem>>, vector<176x64xbf16>
    %c0_1 = arith.constant 0 : index
    %c0_2 = arith.constant 0 : index
    %1 = vector.load %arg2[%c0_1, %c0_2] : memref<64x128xbf16, #tpu.memory_space<vmem>>, vector<64x128xbf16>
    %cst = arith.constant dense<0.000000e+00> : vector<176x128xf32>
    %2 = tpu.matmul %0, %1, %cst {dimension_numbers = #tpu.dot_dimension_numbers<[1], [0], [0], [1], [0, 0, 1, 1], [], []>} : vector<176x64xbf16>, vector<64x128xbf16>, vector<176x128xf32> -> vector<176x128xf32>
    %c0_3 = arith.constant 0 : index
    %c0_4 = arith.constant 0 : index
    %3 = vector.load %arg3[%c0_3, %c0_4] : memref<176x1xi32, #tpu.memory_space<vmem>>, vector<176x1xi32>
    %c0_5 = arith.constant 0 : index
    %c0_6 = arith.constant 0 : index
    %4 = vector.load %arg5[%c0_5, %c0_6] : memref<1x128xi32, #tpu.memory_space<vmem>>, vector<1x128xi32>
    %5 = vector.broadcast %3 : vector<176x1xi32> to vector<176x128xi32>
    %6 = vector.broadcast %4 : vector<1x128xi32> to vector<176x128xi32>
    %7 = arith.addi %5, %6 : vector<176x128xi32>
    %8 = tpu.bitcast %7 : vector<176x128xi32> -> vector<176x128xi32>
    %c0_7 = arith.constant 0 : index
    %c0_8 = arith.constant 0 : index
    %9 = vector.load %arg4[%c0_7, %c0_8] : memref<176x1xi32, #tpu.memory_space<vmem>>, vector<176x1xi32>
    %c0_9 = arith.constant 0 : index
    %c0_10 = arith.constant 0 : index
    %10 = vector.load %arg6[%c0_9, %c0_10] : memref<1x128xi32, #tpu.memory_space<vmem>>, vector<1x128xi32>
    %11 = vector.broadcast %9 : vector<176x1xi32> to vector<176x128xi32>
    %12 = vector.broadcast %10 : vector<1x128xi32> to vector<176x128xi32>
    %13 = arith.addi %11, %12 : vector<176x128xi32>
    %14 = tpu.bitcast %13 : vector<176x128xi32> -> vector<176x128xi32>
    %c32_i32 = arith.constant 32 : i32
    %15 = vector.broadcast %c32_i32 : i32 to vector<176x128xi32>
    %16 = arith.cmpi ult, %8, %15 : vector<176x128xi32>
    %c32_i32_11 = arith.constant 32 : i32
    %17 = vector.broadcast %c32_i32_11 : i32 to vector<176x128xi32>
    %18 = arith.cmpi ult, %14, %17 : vector<176x128xi32>
    %19 = arith.andi %16, %18 : vector<176x128xi1>
    %cst_12 = arith.constant 0.000000e+00 : f32
    %20 = vector.broadcast %cst_12 : f32 to vector<176x128xf32>
    %21 = arith.select %19, %2, %20 : vector<176x128xi1>, vector<176x128xf32>
    %cst_13 = arith.constant dense<0.000000e+00> : vector<128xf32>
    %22 = vector.multi_reduction <add>, %21, %cst_13 [0] : vector<176x128xf32> to vector<128xf32>
    %23 = vector.shape_cast %22 : vector<128xf32> to vector<1x128xf32>
    %c0_14 = arith.constant 0 : index
    %c0_15 = arith.constant 0 : index
    %c0_16 = arith.constant 0 : index
    %24 = vector.load %arg7[%c0_14, %c0_15, %c0_16] : memref<1x2x128xf32, #tpu.memory_space<vmem>>, vector<1x1x128xf32>
    %25 = vector.shape_cast %24 : vector<1x1x128xf32> to vector<1x128xf32>
    %26 = vector.shape_cast %23 : vector<1x128xf32> to vector<1x1x128xf32>
    tpu.vector_store %arg7[%c0_14, %c0_15, %c0_16], %26 {strides = array<i32>} : memref<1x2x128xf32, #tpu.memory_space<vmem>>, vector<1x1x128xf32>,
    %27 = arith.mulf %21, %21 : vector<176x128xf32>
    %cst_17 = arith.constant dense<0.000000e+00> : vector<128xf32>
    %28 = vector.multi_reduction <add>, %27, %cst_17 [0] : vector<176x128xf32> to vector<128xf32>
    %29 = vector.shape_cast %28 : vector<128xf32> to vector<1x128xf32>
    %c0_18 = arith.constant 0 : index
    %c1 = arith.constant 1 : index
    %c0_19 = arith.constant 0 : index
    %30 = vector.load %arg7[%c0_18, %c1, %c0_19] : memref<1x2x128xf32, #tpu.memory_space<vmem>>, vector<1x1x128xf32>
    %31 = vector.shape_cast %30 : vector<1x1x128xf32> to vector<1x128xf32>
    %32 = vector.shape_cast %29 : vector<1x128xf32> to vector<1x1x128xf32>
    tpu.vector_store %arg7[%c0_18, %c1, %c0_19], %32 {strides = array<i32>} : memref<1x2x128xf32, #tpu.memory_space<vmem>>, vector<1x1x128xf32>,
    return
  }
  func.func @transform_0(%arg0: i32) -> (i32, i32) {
    %c0_i32 = arith.constant 0 : i32
    %c0_i32_0 = arith.constant 0 : i32
    return %arg0, %c0_i32 : i32, i32
  }
  func.func @transform_1(%arg0: i32) -> (i32, i32) {
    %c0_i32 = arith.constant 0 : i32
    %c0_i32_0 = arith.constant 0 : i32
    %c0_i32_1 = arith.constant 0 : i32
    return %c0_i32, %c0_i32_0 : i32, i32
  }
  func.func @transform_2(%arg0: i32) -> (i32, i32) {
    %c0_i32 = arith.constant 0 : i32
    %c0_i32_0 = arith.constant 0 : i32
    return %arg0, %c0_i32 : i32, i32
  }
  func.func @transform_3(%arg0: i32) -> (i32, i32) {
    %c0_i32 = arith.constant 0 : i32
    %c0_i32_0 = arith.constant 0 : i32
    return %arg0, %c0_i32 : i32, i32
  }
  func.func @transform_4(%arg0: i32) -> (i32, i32) {
    %c0_i32 = arith.constant 0 : i32
    %c0_i32_0 = arith.constant 0 : i32
    %c0_i32_1 = arith.constant 0 : i32
    return %c0_i32, %c0_i32_0 : i32, i32
  }
  func.func @transform_5(%arg0: i32) -> (i32, i32) {
    %c0_i32 = arith.constant 0 : i32
    %c0_i32_0 = arith.constant 0 : i32
    %c0_i32_1 = arith.constant 0 : i32
    return %c0_i32, %c0_i32_0 : i32, i32
  }
  func.func @transform_6(%arg0: i32) -> (i32, i32, i32) {
    %c0_i32 = arith.constant 0 : i32
    %c0_i32_0 = arith.constant 0 : i32
    %c0_i32_1 = arith.constant 0 : i32
    return %arg0, %c0_i32, %c0_i32_0 : i32, i32, i32
  }
}

module attributes {stable_mosaic.version = 11 : i64} {
  func.func @_apply_kernel(%arg0: i32, %arg1: memref<176x64xbf16, #tpu.memory_space<vmem>>, %arg2: memref<64x128xbf16, #tpu.memory_space<vmem>>, %arg3: memref<1x128xf32, #tpu.memory_space<vmem>>, %arg4: memref<1x128xf32, #tpu.memory_space<vmem>>, %arg5: memref<176x128xf32, #tpu.memory_space<vmem>>) attributes {dimension_semantics = [#tpu.dimension_semantics<parallel>], iteration_bounds = array<i64: 1>, scalar_prefetch = 0 : i64, scratch_operands = 0 : i64, tpu.core_type = #tpu.core_type<tc>, window_params = [{transform_indices = @transform_0, window_bounds = array<i64: 176, 64>}, {pipeline_mode = #tpu.pipeline_mode<synchronous>, transform_indices = @transform_1, window_bounds = array<i64: 64, 128>}, {pipeline_mode = #tpu.pipeline_mode<synchronous>, transform_indices = @transform_2, window_bounds = array<i64: 1, 128>}, {pipeline_mode = #tpu.pipeline_mode<synchronous>, transform_indices = @transform_3, window_bounds = array<i64: 1, 128>}, {transform_indices = @transform_4, window_bounds = array<i64: 176, 128>}]} {
    %c0 = arith.constant 0 : index
    %c0_0 = arith.constant 0 : index
    %0 = vector.load %arg1[%c0, %c0_0] : memref<176x64xbf16, #tpu.memory_space<vmem>>, vector<176x64xbf16>
    %c0_1 = arith.constant 0 : index
    %c0_2 = arith.constant 0 : index
    %1 = vector.load %arg2[%c0_1, %c0_2] : memref<64x128xbf16, #tpu.memory_space<vmem>>, vector<64x128xbf16>
    %cst = arith.constant dense<0.000000e+00> : vector<176x128xf32>
    %2 = tpu.matmul %0, %1, %cst {dimension_numbers = #tpu.dot_dimension_numbers<[1], [0], [0], [1], [0, 0, 1, 1], [], []>} : vector<176x64xbf16>, vector<64x128xbf16>, vector<176x128xf32> -> vector<176x128xf32>
    %c0_3 = arith.constant 0 : index
    %c0_4 = arith.constant 0 : index
    %3 = vector.load %arg3[%c0_3, %c0_4] : memref<1x128xf32, #tpu.memory_space<vmem>>, vector<1x128xf32>
    %4 = vector.broadcast %3 : vector<1x128xf32> to vector<176x128xf32>
    %5 = arith.mulf %2, %4 : vector<176x128xf32>
    %c0_5 = arith.constant 0 : index
    %c0_6 = arith.constant 0 : index
    %6 = vector.load %arg4[%c0_5, %c0_6] : memref<1x128xf32, #tpu.memory_space<vmem>>, vector<1x128xf32>
    %7 = vector.broadcast %6 : vector<1x128xf32> to vector<176x128xf32>
    %8 = arith.addf %5, %7 : vector<176x128xf32>
    %cst_7 = arith.constant 0.000000e+00 : f32
    %9 = vector.broadcast %cst_7 : f32 to vector<176x128xf32>
    %10 = arith.maximumf %8, %9 : vector<176x128xf32>
    %c0_8 = arith.constant 0 : index
    %c0_9 = arith.constant 0 : index
    %11 = vector.load %arg5[%c0_8, %c0_9] : memref<176x128xf32, #tpu.memory_space<vmem>>, vector<176x128xf32>
    tpu.vector_store %arg5[%c0_8, %c0_9], %10 {strides = array<i32>} : memref<176x128xf32, #tpu.memory_space<vmem>>, vector<176x128xf32>,
    return
  }
  func.func @transform_0(%arg0: i32) -> (i32, i32) {
    %c0_i32 = arith.constant 0 : i32
    %c0_i32_0 = arith.constant 0 : i32
    return %arg0, %c0_i32 : i32, i32
  }
  func.func @transform_1(%arg0: i32) -> (i32, i32) {
    %c0_i32 = arith.constant 0 : i32
    %c0_i32_0 = arith.constant 0 : i32
    %c0_i32_1 = arith.constant 0 : i32
    return %c0_i32, %c0_i32_0 : i32, i32
  }
  func.func @transform_2(%arg0: i32) -> (i32, i32) {
    %c0_i32 = arith.constant 0 : i32
    %c0_i32_0 = arith.constant 0 : i32
    %c0_i32_1 = arith.constant 0 : i32
    return %c0_i32, %c0_i32_0 : i32, i32
  }
  func.func @transform_3(%arg0: i32) -> (i32, i32) {
    %c0_i32 = arith.constant 0 : i32
    %c0_i32_0 = arith.constant 0 : i32
    %c0_i32_1 = arith.constant 0 : i32
    return %c0_i32, %c0_i32_0 : i32, i32
  }
  func.func @transform_4(%arg0: i32) -> (i32, i32) {
    %c0_i32 = arith.constant 0 : i32
    %c0_i32_0 = arith.constant 0 : i32
    return %arg0, %c0_i32 : i32, i32
  }
}

</mosaic_0001>

<llo_original>
// kernel: mul.4
$region0: #{mul.4}
  %s0 = inlined_call_operand.vmem [shape: f32[2,2,4,2,2,8], index: 0, kind: input, shape index: {}]
  %s1 = inlined_call_operand.vmem [shape: f32[16,32], index: 1, kind: output, shape index: {}]
  $region1: #{mul.4} parent=0
    #allocation0 [shape = 'u8[131072]{0}', space=vmem, size = 0x20000, scoped, tag = 'scoped mem for input reshape']
    %s3 = ssub.s32 4, 1
    %s4 = scalar_lea.vmem %s0, 62
    %v5 = vld [vmem:[%s4] sm:%s3]
    %s6 = scalar_lea.vmem [#allocation0], 248
    %7 = vst [vmem:[%s6] sm:%s3] %v5
    %s8 = scalar_lea.vmem %s0, 60
    %v9 = vld [vmem:[%s8] sm:%s3]
    %s10 = scalar_lea.vmem [#allocation0], 240
    %11 = vst [vmem:[%s10] sm:%s3] %v9
    %s12 = scalar_lea.vmem %s0, 58
    %v13 = vld [vmem:[%s12] sm:%s3]
    %s14 = scalar_lea.vmem [#allocation0], 232
    %15 = vst [vmem:[%s14] sm:%s3] %v13
    %s16 = scalar_lea.vmem %s0, 56
    %v17 = vld [vmem:[%s16] sm:%s3]
    %s18 = scalar_lea.vmem [#allocation0], 224
    %19 = vst [vmem:[%s18] sm:%s3] %v17
    %s20 = scalar_lea.vmem %s0, 54
    %v21 = vld [vmem:[%s20] sm:%s3]
    %s22 = scalar_lea.vmem [#allocation0], 216
    %23 = vst [vmem:[%s22] sm:%s3] %v21
    %s24 = scalar_lea.vmem %s0, 52
    %v25 = vld [vmem:[%s24] sm:%s3]
    %s26 = scalar_lea.vmem [#allocation0], 208
    %27 = vst [vmem:[%s26] sm:%s3] %v25
    %s28 = scalar_lea.vmem %s0, 50
    %v29 = vld [vmem:[%s28] sm:%s3]
    %s30 = scalar_lea.vmem [#allocation0], 200
    %31 = vst [vmem:[%s30] sm:%s3] %v29
    %s32 = scalar_lea.vmem %s0, 48
    %v33 = vld [vmem:[%s32] sm:%s3]
    %s34 = scalar_lea.vmem [#allocation0], 192
    %35 = vst [vmem:[%s34] sm:%s3] %v33
    %s36 = scalar_lea.vmem %s0, 46
    %v37 = vld [vmem:[%s36] sm:%s3]
    %s38 = scalar_lea.vmem [#allocation0], 184
    %39 = vst [vmem:[%s38] sm:%s3] %v37
    %s40 = scalar_lea.vmem %s0, 44
    %v41 = vld [vmem:[%s40] sm:%s3]
    %s42 = scalar_lea.vmem [#allocation0], 176
    %43 = vst [vmem:[%s42] sm:%s3] %v41
    %s44 = scalar_lea.vmem %s0, 42
    %v45 = vld [vmem:[%s44] sm:%s3]
    %s46 = scalar_lea.vmem [#allocation0], 168
    %47 = vst [vmem:[%s46] sm:%s3] %v45
    %s48 = scalar_lea.vmem %s0, 40
    %v49 = vld [vmem:[%s48] sm:%s3]
    %s50 = scalar_lea.vmem [#allocation0], 160
    %51 = vst [vmem:[%s50] sm:%s3] %v49
    %s52 = scalar_lea.vmem %s0, 38
    %v53 = vld [vmem:[%s52] sm:%s3]
    %s54 = scalar_lea.vmem [#allocation0], 152
    %55 = vst [vmem:[%s54] sm:%s3] %v53
    %s56 = scalar_lea.vmem %s0, 36
    %v57 = vld [vmem:[%s56] sm:%s3]
    %s58 = scalar_lea.vmem [#allocation0], 144
    %59 = vst [vmem:[%s58] sm:%s3] %v57
    %s60 = scalar_lea.vmem %s0, 34
    %v61 = vld [vmem:[%s60] sm:%s3]
    %s62 = scalar_lea.vmem [#allocation0], 136
    %63 = vst [vmem:[%s62] sm:%s3] %v61
    %s64 = scalar_lea.vmem %s0, 32
    %v65 = vld [vmem:[%s64] sm:%s3]
    %s66 = scalar_lea.vmem [#allocation0], 128
    %67 = vst [vmem:[%s66] sm:%s3] %v65
    %s68 = scalar_lea.vmem %s0, 30
    %v69 = vld [vmem:[%s68] sm:%s3]
    %s70 = scalar_lea.vmem [#allocation0], 120
    %71 = vst [vmem:[%s70] sm:%s3] %v69
    %s72 = scalar_lea.vmem %s0, 28
    %v73 = vld [vmem:[%s72] sm:%s3]
    %s74 = scalar_lea.vmem [#allocation0], 112
    %75 = vst [vmem:[%s74] sm:%s3] %v73
    %s76 = scalar_lea.vmem %s0, 26
    %v77 = vld [vmem:[%s76] sm:%s3]
    %s78 = scalar_lea.vmem [#allocation0], 104
    %79 = vst [vmem:[%s78] sm:%s3] %v77
    %s80 = scalar_lea.vmem %s0, 24
    %v81 = vld [vmem:[%s80] sm:%s3]
    %s82 = scalar_lea.vmem [#allocation0], 96
    %83 = vst [vmem:[%s82] sm:%s3] %v81
    %s84 = scalar_lea.vmem %s0, 22
    %v85 = vld [vmem:[%s84] sm:%s3]
    %s86 = scalar_lea.vmem [#allocation0], 88
    %87 = vst [vmem:[%s86] sm:%s3] %v85
    %s88 = scalar_lea.vmem %s0, 20
    %v89 = vld [vmem:[%s88] sm:%s3]
    %s90 = scalar_lea.vmem [#allocation0], 80
    %91 = vst [vmem:[%s90] sm:%s3] %v89
    %s92 = scalar_lea.vmem %s0, 18
    %v93 = vld [vmem:[%s92] sm:%s3]
    %s94 = scalar_lea.vmem [#allocation0], 72
    %95 = vst [vmem:[%s94] sm:%s3] %v93
    %s96 = scalar_lea.vmem %s0, 16
    %v97 = vld [vmem:[%s96] sm:%s3]
    %s98 = scalar_lea.vmem [#allocation0], 64
    %99 = vst [vmem:[%s98] sm:%s3] %v97
    %s100 = scalar_lea.vmem %s0, 14
    %v101 = vld [vmem:[%s100] sm:%s3]
    %s102 = scalar_lea.vmem [#allocation0], 56
    %103 = vst [vmem:[%s102] sm:%s3] %v101
    %s104 = scalar_lea.vmem %s0, 12
    %v105 = vld [vmem:[%s104] sm:%s3]
    %s106 = scalar_lea.vmem [#allocation0], 48
    %107 = vst [vmem:[%s106] sm:%s3] %v105
    %s108 = scalar_lea.vmem %s0, 10
    %v109 = vld [vmem:[%s108] sm:%s3]
    %s110 = scalar_lea.vmem [#allocation0], 40
    %111 = vst [vmem:[%s110] sm:%s3] %v109
    %s112 = scalar_lea.vmem %s0, 8
    %v113 = vld [vmem:[%s112] sm:%s3]
    %s114 = scalar_lea.vmem [#allocation0], 32
    %115 = vst [vmem:[%s114] sm:%s3] %v113
    %s116 = scalar_lea.vmem %s0, 6
    %v117 = vld [vmem:[%s116] sm:%s3]
    %s118 = scalar_lea.vmem [#allocation0], 24
    %119 = vst [vmem:[%s118] sm:%s3] %v117
    %s120 = scalar_lea.vmem %s0, 4
    %v121 = vld [vmem:[%s120] sm:%s3]
    %s122 = scalar_lea.vmem [#allocation0], 16
    %123 = vst [vmem:[%s122] sm:%s3] %v121
    %s124 = scalar_lea.vmem %s0, 2
    %v125 = vld [vmem:[%s124] sm:%s3]
    %s126 = scalar_lea.vmem [#allocation0], 8
    %127 = vst [vmem:[%s126] sm:%s3] %v125
    %v128 = vld [vmem:[%s0] sm:%s3]
    %129 = vst [vmem:[#allocation0] sm:%s3] %v128
    %s130 = smov 3
    %v131 = vld [vmem:[#allocation0] ss:$16 sm:%s130]
    %s132 = smov 12
    %v133 = vld [vmem:[#allocation0] ss:$16 sm:%s132]
    %vm134 = vcmask 1043458
    %v135 = vsel %vm134, %v133, %v131
    %s136 = smov 48
    %v137 = vld [vmem:[#allocation0] ss:$16 sm:%s136]
    %vm138 = vcmask 1045508
    %v139 = vsel %vm138, %v137, %v135
    %s140 = smov 192
    %v141 = vld [vmem:[#allocation0] ss:$16 sm:%s140]
    %vm142 = vcmask 1047558
    %v143 = vsel %vm142, %v141, %v139
    %vm144 = vcmask 64512
    %145 = vst.msk [vmem:[%s1] sm:$0xff] %vm144, %v143
    %s146 = scalar_lea.vmem [#allocation0], 128
    %s147 = smov 3
    %v148 = vld [vmem:[%s146] ss:$16 sm:%s147]
    %s149 = scalar_lea.vmem [#allocation0], 128
    %s150 = smov 12
    %v151 = vld [vmem:[%s149] ss:$16 sm:%s150]
    %vm152 = vcmask 1043458
    %v153 = vsel %vm152, %v151, %v148
    %s154 = scalar_lea.vmem [#allocation0], 128
    %s155 = smov 48
    %v156 = vld [vmem:[%s154] ss:$16 sm:%s155]
    %vm157 = vcmask 1045508
    %v158 = vsel %vm157, %v156, %v153
    %s159 = scalar_lea.vmem [#allocation0], 128
    %s160 = smov 192
    %v161 = vld [vmem:[%s159] ss:$16 sm:%s160]
    %vm162 = vcmask 1047558
    %v163 = vsel %vm162, %v161, %v158
    %vm164 = vcmask 64512
    %s165 = scalar_lea.vmem %s1, 8
    %166 = vst.msk [vmem:[%s165] sm:$0xff] %vm164, %v163
    %s167 = scalar_lea.vmem [#allocation0], 9
    %s168 = smov 3
    %v169 = vld [vmem:[%s167] ss:$16 sm:%s168]
    %s170 = scalar_lea.vmem [#allocation0], 9
    %s171 = smov 12
    %v172 = vld [vmem:[%s170] ss:$16 sm:%s171]
    %vm173 = vcmask 1043458
    %v174 = vsel %vm173, %v172, %v169
    %s175 = scalar_lea.vmem [#allocation0], 9
    %s176 = smov 48
    %v177 = vld [vmem:[%s175] ss:$16 sm:%s176]
    %vm178 = vcmask 1045508
    %v179 = vsel %vm178, %v177, %v174
    %s180 = scalar_lea.vmem [#allocation0], 9
    %s181 = smov 192
    %v182 = vld [vmem:[%s180] ss:$16 sm:%s181]
    %vm183 = vcmask 1047558
    %v184 = vsel %vm183, %v182, %v179
    %185 = vrot.lane.b32.xlu0 %v184, 24
    %v186 = vpop.permute.xlu0 %185
    %vm187 = vcmask 261312
    %188 = vst.msk [vmem:[%s1] sm:$0xff] %vm187, %v186
    %s189 = scalar_lea.vmem [#allocation0], 137
    %s190 = smov 3
    %v191 = vld [vmem:[%s189] ss:$16 sm:%s190]
    %s192 = scalar_lea.vmem [#allocation0], 137
    %s193 = smov 12
    %v194 = vld [vmem:[%s192] ss:$16 sm:%s193]
    %vm195 = vcmask 1043458
    %v196 = vsel %vm195, %v194, %v191
    %s197 = scalar_lea.vmem [#allocation0], 137
    %s198 = smov 48
    %v199 = vld [vmem:[%s197] ss:$16 sm:%s198]
    %vm200 = vcmask 1045508
    %v201 = vsel %vm200, %v199, %v196
    %s202 = scalar_lea.vmem [#allocation0], 137
    %s203 = smov 192
    %v204 = vld [vmem:[%s202] ss:$16 sm:%s203]
    %vm205 = vcmask 1047558
    %v206 = vsel %vm205, %v204, %v201
    %207 = vrot.lane.b32.xlu0 %v206, 24
    %v208 = vpop.permute.xlu0 %207
    %vm209 = vcmask 261312
    %s210 = scalar_lea.vmem %s1, 8
    %211 = vst.msk [vmem:[%s210] sm:$0xff] %vm209, %v208
    %s212 = scalar_lea.vmem [#allocation0], 8
    %s213 = smov 3
    %v214 = vld [vmem:[%s212] ss:$16 sm:%s213]
    %s215 = scalar_lea.vmem [#allocation0], 8
    %s216 = smov 12
    %v217 = vld [vmem:[%s215] ss:$16 sm:%s216]
    %vm218 = vcmask 1043458
    %v219 = vsel %vm218, %v217, %v214
    %s220 = scalar_lea.vmem [#allocation0], 8
    %s221 = smov 48
    %v222 = vld [vmem:[%s220] ss:$16 sm:%s221]
    %vm223 = vcmask 1045508
    %v224 = vsel %vm223, %v222, %v219
    %s225 = scalar_lea.vmem [#allocation0], 8
    %s226 = smov 192
    %v227 = vld [vmem:[%s225] ss:$16 sm:%s226]
    %vm228 = vcmask 1047558
    %v229 = vsel %vm228, %v227, %v224
    %230 = vrot.lane.b32.xlu0 %v229, 16
    %v231 = vpop.permute.xlu0 %230
    %vm232 = vcmask 195712
    %233 = vst.msk [vmem:[%s1] sm:$0xff] %vm232, %v231
    %s234 = scalar_lea.vmem [#allocation0], 136
    %s235 = smov 3
    %v236 = vld [vmem:[%s234] ss:$16 sm:%s235]
    %s237 = scalar_lea.vmem [#allocation0], 136
    %s238 = smov 12
    %v239 = vld [vmem:[%s237] ss:$16 sm:%s238]
    %vm240 = vcmask 1043458
    %v241 = vsel %vm240, %v239, %v236
    %s242 = scalar_lea.vmem [#allocation0], 136
    %s243 = smov 48
    %v244 = vld [vmem:[%s242] ss:$16 sm:%s243]
    %vm245 = vcmask 1045508
    %v246 = vsel %vm245, %v244, %v241
    %s247 = scalar_lea.vmem [#allocation0], 136
    %s248 = smov 192
    %v249 = vld [vmem:[%s247] ss:$16 sm:%s248]
    %vm250 = vcmask 1047558
    %v251 = vsel %vm250, %v249, %v246
    %252 = vrot.lane.b32.xlu0 %v251, 16
    %v253 = vpop.permute.xlu0 %252
    %vm254 = vcmask 195712
    %s255 = scalar_lea.vmem %s1, 8
    %256 = vst.msk [vmem:[%s255] sm:$0xff] %vm254, %v253
    %s257 = scalar_lea.vmem [#allocation0], 1
    %s258 = smov 3
    %v259 = vld [vmem:[%s257] ss:$16 sm:%s258]
    %s260 = scalar_lea.vmem [#allocation0], 1
    %s261 = smov 12
    %v262 = vld [vmem:[%s260] ss:$16 sm:%s261]
    %vm263 = vcmask 1043458
    %v264 = vsel %vm263, %v262, %v259
    %s265 = scalar_lea.vmem [#allocation0], 1
    %s266 = smov 48
    %v267 = vld [vmem:[%s265] ss:$16 sm:%s266]
    %vm268 = vcmask 1045508
    %v269 = vsel %vm268, %v267, %v264
    %s270 = scalar_lea.vmem [#allocation0], 1
    %s271 = smov 192
    %v272 = vld [vmem:[%s270] ss:$16 sm:%s271]
    %vm273 = vcmask 1047558
    %v274 = vsel %vm273, %v272, %v269
    %275 = vrot.lane.b32.xlu0 %v274, 8
    %v276 = vpop.permute.xlu0 %275
    %vm277 = vcmask 130112
    %278 = vst.msk [vmem:[%s1] sm:$0xff] %vm277, %v276
    %s279 = scalar_lea.vmem [#allocation0], 129
    %s280 = smov 3
    %v281 = vld [vmem:[%s279] ss:$16 sm:%s280]
    %s282 = scalar_lea.vmem [#allocation0], 129
    %s283 = smov 12
    %v284 = vld [vmem:[%s282] ss:$16 sm:%s283]
    %vm285 = vcmask 1043458
    %v286 = vsel %vm285, %v284, %v281
    %s287 = scalar_lea.vmem [#allocation0], 129
    %s288 = smov 48
    %v289 = vld [vmem:[%s287] ss:$16 sm:%s288]
    %vm290 = vcmask 1045508
    %v291 = vsel %vm290, %v289, %v286
    %s292 = scalar_lea.vmem [#allocation0], 129
    %s293 = smov 192
    %v294 = vld [vmem:[%s292] ss:$16 sm:%s293]
    %vm295 = vcmask 1047558
    %v296 = vsel %vm295, %v294, %v291
    %297 = vrot.lane.b32.xlu0 %v296, 8
    %v298 = vpop.permute.xlu0 %297
    %vm299 = vcmask 130112
    %s300 = scalar_lea.vmem %s1, 8
    %301 = vst.msk [vmem:[%s300] sm:$0xff] %vm299, %v298

// kernel: squeeze.34
$region0: #{squeeze.34}
  %s0 = inlined_call_operand.vmem [shape: f32[128], index: 0, kind: input, shape index: {}]
  %s1 = inlined_call_operand.vmem [shape: f32[16,8], index: 1, kind: output, shape index: {}]
  $region1: #{squeeze.34} parent=0
    #allocation0 [shape = 'u8[4096]{0}', space=vmem, size = 0x1000, scoped, tag = 'scoped mem for input reshape']
    %s3 = ssub.s32 2, 1
    %v4 = vld [vmem:[%s0] sm:%s3]
    %5 = vst [vmem:[#allocation0] sm:%s3] %v4
    %v6 = vld [vmem:[#allocation0] sm:$0x1]
    %vm7 = vcmask 64512
    %8 = vst.msk [vmem:[%s1] sm:$0x1] %vm7, %v6
    %v9 = vld [vmem:[#allocation0] sm:$0x1]
    %10 = vrot.lane.b32.xlu0 %v9, 120
    %v11 = vpop.permute.xlu0 %10
    %vm12 = vcmask 64512
    %s13 = scalar_lea.vmem %s1, 1
    %14 = vst.msk [vmem:[%s13] sm:$0x1] %vm12, %v11
    %v15 = vld [vmem:[#allocation0] sm:$0x1]
    %16 = vrot.lane.b32.xlu0 %v15, 112
    %v17 = vpop.permute.xlu0 %16
    %vm18 = vcmask 64512
    %s19 = scalar_lea.vmem %s1, 2
    %20 = vst.msk [vmem:[%s19] sm:$0x1] %vm18, %v17
    %v21 = vld [vmem:[#allocation0] sm:$0x1]
    %22 = vrot.lane.b32.xlu0 %v21, 104
    %v23 = vpop.permute.xlu0 %22
    %vm24 = vcmask 64512
    %s25 = scalar_lea.vmem %s1, 3
    %26 = vst.msk [vmem:[%s25] sm:$0x1] %vm24, %v23
    %v27 = vld [vmem:[#allocation0] sm:$0x1]
    %28 = vrot.lane.b32.xlu0 %v27, 96
    %v29 = vpop.permute.xlu0 %28
    %vm30 = vcmask 64512
    %s31 = scalar_lea.vmem %s1, 4
    %32 = vst.msk [vmem:[%s31] sm:$0x1] %vm30, %v29
    %v33 = vld [vmem:[#allocation0] sm:$0x1]
    %34 = vrot.lane.b32.xlu0 %v33, 88
    %v35 = vpop.permute.xlu0 %34
    %vm36 = vcmask 64512
    %s37 = scalar_lea.vmem %s1, 5
    %38 = vst.msk [vmem:[%s37] sm:$0x1] %vm36, %v35
    %v39 = vld [vmem:[#allocation0] sm:$0x1]
    %40 = vrot.lane.b32.xlu0 %v39, 80
    %v41 = vpop.permute.xlu0 %40
    %vm42 = vcmask 64512
    %s43 = scalar_lea.vmem %s1, 6
    %44 = vst.msk [vmem:[%s43] sm:$0x1] %vm42, %v41
    %v45 = vld [vmem:[#allocation0] sm:$0x1]
    %46 = vrot.lane.b32.xlu0 %v45, 72
    %v47 = vpop.permute.xlu0 %46
    %vm48 = vcmask 64512
    %s49 = scalar_lea.vmem %s1, 7
    %50 = vst.msk [vmem:[%s49] sm:$0x1] %vm48, %v47
    %v51 = vld [vmem:[#allocation0] sm:$0x1]
    %52 = vrot.lane.b32.xlu0 %v51, 64
    %v53 = vpop.permute.xlu0 %52
    %vm54 = vcmask 64512
    %s55 = scalar_lea.vmem %s1, 8
    %56 = vst.msk [vmem:[%s55] sm:$0x1] %vm54, %v53
    %v57 = vld [vmem:[#allocation0] sm:$0x1]
    %58 = vrot.lane.b32.xlu0 %v57, 56
    %v59 = vpop.permute.xlu0 %58
    %vm60 = vcmask 64512
    %s61 = scalar_lea.vmem %s1, 9
    %62 = vst.msk [vmem:[%s61] sm:$0x1] %vm60, %v59
    %v63 = vld [vmem:[#allocation0] sm:$0x1]
    %64 = vrot.lane.b32.xlu0 %v63, 48
    %v65 = vpop.permute.xlu0 %64
    %vm66 = vcmask 64512
    %s67 = scalar_lea.vmem %s1, 10
    %68 = vst.msk [vmem:[%s67] sm:$0x1] %vm66, %v65
    %v69 = vld [vmem:[#allocation0] sm:$0x1]
    %70 = vrot.lane.b32.xlu0 %v69, 40
    %v71 = vpop.permute.xlu0 %70
    %vm72 = vcmask 64512
    %s73 = scalar_lea.vmem %s1, 11
    %74 = vst.msk [vmem:[%s73] sm:$0x1] %vm72, %v71
    %v75 = vld [vmem:[#allocation0] sm:$0x1]
    %76 = vrot.lane.b32.xlu0 %v75, 32
    %v77 = vpop.permute.xlu0 %76
    %vm78 = vcmask 64512
    %s79 = scalar_lea.vmem %s1, 12
    %80 = vst.msk [vmem:[%s79] sm:$0x1] %vm78, %v77
    %v81 = vld [vmem:[#allocation0] sm:$0x1]
    %82 = vrot.lane.b32.xlu0 %v81, 24
    %v83 = vpop.permute.xlu0 %82
    %vm84 = vcmask 64512
    %s85 = scalar_lea.vmem %s1, 13
    %86 = vst.msk [vmem:[%s85] sm:$0x1] %vm84, %v83
    %v87 = vld [vmem:[#allocation0] sm:$0x1]
    %88 = vrot.lane.b32.xlu0 %v87, 16
    %v89 = vpop.permute.xlu0 %88
    %vm90 = vcmask 64512
    %s91 = scalar_lea.vmem %s1, 14
    %92 = vst.msk [vmem:[%s91] sm:$0x1] %vm90, %v89
    %v93 = vld [vmem:[#allocation0] sm:$0x1]
    %94 = vrot.lane.b32.xlu0 %v93, 8
    %v95 = vpop.permute.xlu0 %94
    %vm96 = vcmask 64512
    %s97 = scalar_lea.vmem %s1, 15
    %98 = vst.msk [vmem:[%s97] sm:$0x1] %vm96, %v95

// kernel: basic_deconv2d.3
$region0: #{basic_deconv2d.3}
  #allocation0 [shape = 'u32[]', space=smem, size = 0x4, offset = 0x4, fixed_abs, tag = 'smem constant byte address 0x4 - core index']
  #allocation1 [shape = 'u32[72,128]{1,0:T(1,128)}', space=vmem, size = 0x9000, scoped, tag = 'internal scratch']
  %s0 = inlined_call_operand.vmem [shape: bf16[176,64], index: 0, kind: input, shape index: {}]
  %s1 = inlined_call_operand.vmem [shape: bf16[64,128], index: 1, kind: input, shape index: {}]
  %s2 = inlined_call_operand.vmem [shape: f32[1,128], index: 2, kind: input, shape index: {}]
  %s3 = inlined_call_operand.vmem [shape: f32[1,128], index: 3, kind: input, shape index: {}]
  %s4 = inlined_call_operand.vmem [shape: f32[176,128], index: 4, kind: output, shape index: {}]
  %s5 = sld [smem:[#allocation0]]
  $region26: #{basic_deconv2d.3} parent=0
    _
  %s7 = ssub.s32 1, %s5
  %s8 = scalar_select 0, %s7, %s5
  // Predicated region
  $region2: #{basic_deconv2d.3} parent=0 // pred_check
    _
  $region3: #{basic_deconv2d.3} parent=0 // pred_check_branch
    %10 = sbr.rel (0) target = $region5
  $region4: #{basic_deconv2d.3} parent=0 // pred_region
    _
  $region5: #{basic_deconv2d.3} parent=0 // pred_fallthru
    _
  // Predicated region
  $region6: #{basic_deconv2d.3} parent=0 // pred_check
    _
  $region7: #{basic_deconv2d.3} parent=0 // pred_check_branch
    %12 = sbr.rel (0) target = $region9
  $region8: #{basic_deconv2d.3} parent=0 // pred_region
    _
  $region9: #{basic_deconv2d.3} parent=0 // pred_fallthru
    _
  // Predicated region
  $region10: #{basic_deconv2d.3} parent=0 // pred_check
    _
  $region11: #{basic_deconv2d.3} parent=0 // pred_check_branch
    %14 = sbr.rel (0) target = $region13
  $region12: #{basic_deconv2d.3} parent=0 // pred_region
    _
  $region13: #{basic_deconv2d.3} parent=0 // pred_fallthru
    _
  // Predicated region
  $region14: #{basic_deconv2d.3} parent=0 // pred_check
    _
  $region15: #{basic_deconv2d.3} parent=0 // pred_check_branch
    %16 = sbr.rel (0) target = $region17
  $region16: #{basic_deconv2d.3} parent=0 // pred_region
    _
  $region17: #{basic_deconv2d.3} parent=0 // pred_fallthru
    _
  %v18 = vld [vmem:[%s0] sm:$0xf]
  %v19 = vld [vmem:[%s0 + $0x4] sm:$0xf]
  %v20 = vld [vmem:[%s0 + $0x8] sm:$0xf]
  %v21 = vld [vmem:[%s0 + $0xc] sm:$0xf]
  %v22 = vld [vmem:[%s0 + $0x10] sm:$0xf]
  %v23 = vld [vmem:[%s0 + $0x14] sm:$0xf]
  %v24 = vld [vmem:[%s0 + $0x18] sm:$0xf]
  %v25 = vld [vmem:[%s0 + $0x1c] sm:$0xf]
  %v26 = vld [vmem:[%s0 + $0x20] sm:$0xf]
  %v27 = vld [vmem:[%s0 + $0x24] sm:$0xf]
  %v28 = vld [vmem:[%s0 + $0x28] sm:$0xf]
  %v29 = vld [vmem:[%s0 + $0x2c] sm:$0xf]
  %v30 = vld [vmem:[%s0 + $0x30] sm:$0xf]
  %v31 = vld [vmem:[%s0 + $0x34] sm:$0xf]
  %v32 = vld [vmem:[%s0 + $0x38] sm:$0xf]
  %v33 = vld [vmem:[%s0 + $0x3c] sm:$0xf]
  %v34 = vld [vmem:[%s0 + $0x40] sm:$0xf]
  %v35 = vld [vmem:[%s0 + $0x44] sm:$0xf]
  %v36 = vld [vmem:[%s0 + $0x48] sm:$0xf]
  %v37 = vld [vmem:[%s0 + $0x4c] sm:$0xf]
  %v38 = vld [vmem:[%s0 + $0x50] sm:$0xf]
  %v39 = vld [vmem:[%s0 + $0x54] sm:$0xf]
  %v40 = vld [vmem:[%s1] sm:$0xf]
  %v41 = vld [vmem:[%s1 + $0x4] sm:$0xf]
  %v42 = vld [vmem:[%s1 + $0x8] sm:$0xf]
  %v43 = vld [vmem:[%s1 + $0xc] sm:$0xf]
  %v44 = vld [vmem:[%s1 + $0x10] sm:$0xf]
  %v45 = vld [vmem:[%s1 + $0x14] sm:$0xf]
  %v46 = vld [vmem:[%s1 + $0x18] sm:$0xf]
  %v47 = vld [vmem:[%s1 + $0x1c] sm:$0xf]
  %v70 = vunpack.c.l.b16 %v18
  %v71 = vunpack.c.l.b16 %v19
  %v72 = vunpack.c.l.b16 %v20
  %v73 = vunpack.c.l.b16 %v21
  %v74 = vunpack.c.l.b16 %v22
  %v75 = vunpack.c.l.b16 %v23
  %v76 = vunpack.c.l.b16 %v24
  %v77 = vunpack.c.l.b16 %v25
  %v78 = vunpack.c.l.b16 %v26
  %v79 = vunpack.c.l.b16 %v27
  %v80 = vunpack.c.l.b16 %v28
  %v81 = vunpack.c.l.b16 %v29
  %v82 = vunpack.c.l.b16 %v30
  %v83 = vunpack.c.l.b16 %v31
  %v84 = vunpack.c.l.b16 %v32
  %v85 = vunpack.c.l.b16 %v33
  %v86 = vunpack.c.l.b16 %v34
  %v87 = vunpack.c.l.b16 %v35
  %v88 = vunpack.c.l.b16 %v36
  %v89 = vunpack.c.l.b16 %v37
  %v90 = vunpack.c.l.b16 %v38
  %v91 = vunpack.c.l.b16 %v39
  %v92 = vpack.c.b16 %v71, %v70
  %v93 = vpack.c.b16 %v73, %v72
  %v94 = vpack.c.b16 %v75, %v74
  %v95 = vpack.c.b16 %v77, %v76
  %v96 = vpack.c.b16 %v79, %v78
  %v97 = vpack.c.b16 %v81, %v80
  %v98 = vpack.c.b16 %v83, %v82
  %v99 = vpack.c.b16 %v85, %v84
  %v100 = vpack.c.b16 %v87, %v86
  %v101 = vpack.c.b16 %v89, %v88
  %v102 = vpack.c.b16 %v91, %v90
  %v111 = vunpack.c.l.b16 %v40
  %v112 = vunpack.c.l.b16 %v41
  %v113 = vunpack.c.l.b16 %v42
  %v114 = vunpack.c.l.b16 %v43
  %v115 = vunpack.c.l.b16 %v44
  %v116 = vunpack.c.l.b16 %v45
  %v117 = vunpack.c.l.b16 %v46
  %v118 = vunpack.c.l.b16 %v47
  %v119 = vpack.c.b16 %v112, %v111
  %v120 = vpack.c.b16 %v114, %v113
  %v121 = vpack.c.b16 %v116, %v115
  %v122 = vpack.c.b16 %v118, %v117
  %vm127 = vcmask 523264
  %v129 = vsel %vm127, %v92, 0
  %v132 = vsel %vm127, %v93, 0
  %v135 = vsel %vm127, %v94, 0
  %v138 = vsel %vm127, %v95, 0
  %v141 = vsel %vm127, %v96, 0
  %v144 = vsel %vm127, %v97, 0
  %v147 = vsel %vm127, %v98, 0
  %v150 = vsel %vm127, %v99, 0
  %v153 = vsel %vm127, %v100, 0
  %v156 = vsel %vm127, %v101, 0
  %v159 = vsel %vm127, %v102, 0
  %161 = vmatpush.bf16.msra.mxu0 0
  %162 = vmatpush.bf16.msra.mxu0 0
  %163 = vmatpush.bf16.msra.mxu0 0
  %164 = vmatpush.bf16.msra.mxu0 0
  %165 = vmatpush.bf16.msra.mxu0 %v122
  %166 = vmatpush.bf16.msra.mxu0 %v121
  %167 = vmatpush.bf16.msra.mxu0 %v120
  %168 = vmatpush.bf16.msra.mxu0 %v119
  %169 = vmatmul.bf16.gmra.mxu0 %v129
  %v170 = vpop.f32.mrf.mxu0
  %v171 = vadd.f32 0.0, %v170
  %v172 = vpop.f32.mrf.mxu0
  %v173 = vadd.f32 0.0, %v172
  %174 = vmatmul.bf16.gmra.mxu0 %v132
  %v175 = vpop.f32.mrf.mxu0
  %v176 = vadd.f32 0.0, %v175
  %v177 = vpop.f32.mrf.mxu0
  %v178 = vadd.f32 0.0, %v177
  %179 = vmatmul.bf16.gmra.mxu0 %v135
  %v180 = vpop.f32.mrf.mxu0
  %v181 = vadd.f32 0.0, %v180
  %v182 = vpop.f32.mrf.mxu0
  %v183 = vadd.f32 0.0, %v182
  %184 = vmatmul.bf16.gmra.mxu0 %v138
  %v185 = vpop.f32.mrf.mxu0
  %v186 = vadd.f32 0.0, %v185
  %v187 = vpop.f32.mrf.mxu0
  %v188 = vadd.f32 0.0, %v187
  %189 = vmatmul.bf16.gmra.mxu0 %v141
  %v190 = vpop.f32.mrf.mxu0
  %v191 = vadd.f32 0.0, %v190
  %v192 = vpop.f32.mrf.mxu0
  %v193 = vadd.f32 0.0, %v192
  %194 = vmatmul.bf16.gmra.mxu0 %v144
  %v195 = vpop.f32.mrf.mxu0
  %v196 = vadd.f32 0.0, %v195
  %v197 = vpop.f32.mrf.mxu0
  %v198 = vadd.f32 0.0, %v197
  %199 = vmatmul.bf16.gmra.mxu0 %v147
  %v200 = vpop.f32.mrf.mxu0
  %v201 = vadd.f32 0.0, %v200
  %v202 = vpop.f32.mrf.mxu0
  %v203 = vadd.f32 0.0, %v202
  %204 = vmatmul.bf16.gmra.mxu0 %v150
  %v205 = vpop.f32.mrf.mxu0
  %v206 = vadd.f32 0.0, %v205
  %v207 = vpop.f32.mrf.mxu0
  %v208 = vadd.f32 0.0, %v207
  %209 = vmatmul.bf16.gmra.mxu0 %v153
  %v210 = vpop.f32.mrf.mxu0
  %v211 = vadd.f32 0.0, %v210
  %v212 = vpop.f32.mrf.mxu0
  %v213 = vadd.f32 0.0, %v212
  %214 = vmatmul.bf16.gmra.mxu0 %v156
  %v215 = vpop.f32.mrf.mxu0
  %v216 = vadd.f32 0.0, %v215
  %v217 = vpop.f32.mrf.mxu0
  %v218 = vadd.f32 0.0, %v217
  %219 = vmatmul.bf16.gmra.mxu0 %v159
  %v220 = vpop.f32.mrf.mxu0
  %v221 = vadd.f32 0.0, %v220
  %v222 = vpop.f32.mrf.mxu0
  %v223 = vadd.f32 0.0, %v222
  %224 = vdwg.mxu0
  %v225 = vld [vmem:[%s2] sm:$0x1]
  %v227 = vperm.slane %v225, 0
  %v229 = vmul.f32 %v171, %v227
  %v230 = vmul.f32 %v173, %v227
  %v231 = vmul.f32 %v176, %v227
  %v232 = vmul.f32 %v178, %v227
  %v233 = vmul.f32 %v181, %v227
  %v234 = vmul.f32 %v183, %v227
  %v235 = vmul.f32 %v186, %v227
  %v236 = vmul.f32 %v188, %v227
  %v237 = vmul.f32 %v191, %v227
  %v238 = vmul.f32 %v193, %v227
  %v239 = vmul.f32 %v196, %v227
  %v240 = vmul.f32 %v198, %v227
  %v241 = vmul.f32 %v201, %v227
  %v242 = vmul.f32 %v203, %v227
  %v243 = vmul.f32 %v206, %v227
  %v244 = vmul.f32 %v208, %v227
  %v245 = vmul.f32 %v211, %v227
  %v246 = vmul.f32 %v213, %v227
  %v247 = vmul.f32 %v216, %v227
  %v248 = vmul.f32 %v218, %v227
  %v249 = vmul.f32 %v221, %v227
  %v250 = vmul.f32 %v223, %v227
  %v251 = vld [vmem:[%s3] sm:$0x1]
  %v253 = vperm.slane %v251, 0
  %v255 = vadd.f32 %v229, %v253
  %v256 = vadd.f32 %v230, %v253
  %v257 = vadd.f32 %v231, %v253
  %v258 = vadd.f32 %v232, %v253
  %v259 = vadd.f32 %v233, %v253
  %v260 = vadd.f32 %v234, %v253
  %v261 = vadd.f32 %v235, %v253
  %v262 = vadd.f32 %v236, %v253
  %v263 = vadd.f32 %v237, %v253
  %v264 = vadd.f32 %v238, %v253
  %v265 = vadd.f32 %v239, %v253
  %v266 = vadd.f32 %v240, %v253
  %v267 = vadd.f32 %v241, %v253
  %v268 = vadd.f32 %v242, %v253
  %v269 = vadd.f32 %v243, %v253
  %v270 = vadd.f32 %v244, %v253
  %v271 = vadd.f32 %v245, %v253
  %v272 = vadd.f32 %v246, %v253
  %v273 = vadd.f32 %v247, %v253
  %v274 = vadd.f32 %v248, %v253
  %v275 = vadd.f32 %v249, %v253
  %v276 = vadd.f32 %v250, %v253
  %v277 = vmax.f32 %v255, 0.0
  %v278 = vmax.f32 %v256, 0.0
  %v279 = vmax.f32 %v257, 0.0
  %v280 = vmax.f32 %v258, 0.0
  %v281 = vmax.f32 %v259, 0.0
  %v282 = vmax.f32 %v260, 0.0
  %v283 = vmax.f32 %v261, 0.0
  %v284 = vmax.f32 %v262, 0.0
  %v285 = vmax.f32 %v263, 0.0
  %v286 = vmax.f32 %v264, 0.0
  %v287 = vmax.f32 %v265, 0.0
  %v288 = vmax.f32 %v266, 0.0
  %v289 = vmax.f32 %v267, 0.0
  %v290 = vmax.f32 %v268, 0.0
  %v291 = vmax.f32 %v269, 0.0
  %v292 = vmax.f32 %v270, 0.0
  %v293 = vmax.f32 %v271, 0.0
  %v294 = vmax.f32 %v272, 0.0
  %v295 = vmax.f32 %v273, 0.0
  %v296 = vmax.f32 %v274, 0.0
  %v297 = vmax.f32 %v275, 0.0
  %v298 = vmax.f32 %v276, 0.0
  %299 = vst [vmem:[%s4] sm:$0xff] %v277
  %300 = vst [vmem:[%s4 + $0x8] sm:$0xff] %v278
  %301 = vst [vmem:[%s4 + $0x10] sm:$0xff] %v279
  %302 = vst [vmem:[%s4 + $0x18] sm:$0xff] %v280
  %303 = vst [vmem:[%s4 + $0x20] sm:$0xff] %v281
  %304 = vst [vmem:[%s4 + $0x28] sm:$0xff] %v282
  %305 = vst [vmem:[%s4 + $0x30] sm:$0xff] %v283
  %306 = vst [vmem:[%s4 + $0x38] sm:$0xff] %v284
  %307 = vst [vmem:[%s4 + $0x40] sm:$0xff] %v285
  %308 = vst [vmem:[%s4 + $0x48] sm:$0xff] %v286
  %309 = vst [vmem:[%s4 + $0x50] sm:$0xff] %v287
  %310 = vst [vmem:[%s4 + $0x58] sm:$0xff] %v288
  %311 = vst [vmem:[%s4 + $0x60] sm:$0xff] %v289
  %312 = vst [vmem:[%s4 + $0x68] sm:$0xff] %v290
  %313 = vst [vmem:[%s4 + $0x70] sm:$0xff] %v291
  %314 = vst [vmem:[%s4 + $0x78] sm:$0xff] %v292
  %315 = vst [vmem:[%s4 + $0x80] sm:$0xff] %v293
  %316 = vst [vmem:[%s4 + $0x88] sm:$0xff] %v294
  %317 = vst [vmem:[%s4 + $0x90] sm:$0xff] %v295
  %318 = vst [vmem:[%s4 + $0x98] sm:$0xff] %v296
  %319 = vst [vmem:[%s4 + $0xa0] sm:$0xff] %v297
  %320 = vst [vmem:[%s4 + $0xa8] sm:$0xff] %v298
  // Predicated region
  $region18: #{basic_deconv2d.3} parent=0 // pred_check
    _
  $region19: #{basic_deconv2d.3} parent=0 // pred_check_branch
    %322 = sbr.rel (0) target = $region21
  $region20: #{basic_deconv2d.3} parent=0 // pred_region
    _
  $region21: #{basic_deconv2d.3} parent=0 // pred_fallthru
    _
  // Predicated region
  $region22: #{basic_deconv2d.3} parent=0 // pred_check
    _
  $region23: #{basic_deconv2d.3} parent=0 // pred_check_branch
    %324 = sbr.rel (0) target = $region25
  $region24: #{basic_deconv2d.3} parent=0 // pred_region
    _
  $region25: #{basic_deconv2d.3} parent=0 // pred_fallthru
    _

// kernel: basic_deconv2d.2
$region0: #{basic_deconv2d.2}
  #allocation0 [shape = 'u32[]', space=smem, size = 0x4, offset = 0x4, fixed_abs, tag = 'smem constant byte address 0x4 - core index']
  #allocation1 [shape = 'u32[72,128]{1,0:T(1,128)}', space=vmem, size = 0x9000, scoped, tag = 'internal scratch']
  %s0 = inlined_call_operand.vmem [shape: bf16[176,64], index: 0, kind: input, shape index: {}]
  %s1 = inlined_call_operand.vmem [shape: bf16[64,128], index: 1, kind: input, shape index: {}]
  %s2 = inlined_call_operand.vmem [shape: s32[176,1], index: 2, kind: input, shape index: {}]
  %s3 = inlined_call_operand.vmem [shape: s32[176,1], index: 3, kind: input, shape index: {}]
  %s4 = inlined_call_operand.vmem [shape: s32[1,128], index: 4, kind: input, shape index: {}]
  %s5 = inlined_call_operand.vmem [shape: s32[1,128], index: 5, kind: input, shape index: {}]
  %s6 = inlined_call_operand.vmem [shape: f32[1,2,128], index: 6, kind: output, shape index: {}]
  %s7 = sld [smem:[#allocation0]]
  $region34: #{basic_deconv2d.2} parent=0
    _
  %s9 = ssub.s32 1, %s7
  %s10 = scalar_select 0, %s9, %s7
  // Predicated region
  $region2: #{basic_deconv2d.2} parent=0 // pred_check
    _
  $region3: #{basic_deconv2d.2} parent=0 // pred_check_branch
    %12 = sbr.rel (0) target = $region5
  $region4: #{basic_deconv2d.2} parent=0 // pred_region
    _
  $region5: #{basic_deconv2d.2} parent=0 // pred_fallthru
    _
  // Predicated region
  $region6: #{basic_deconv2d.2} parent=0 // pred_check
    _
  $region7: #{basic_deconv2d.2} parent=0 // pred_check_branch
    %14 = sbr.rel (0) target = $region9
  $region8: #{basic_deconv2d.2} parent=0 // pred_region
    _
  $region9: #{basic_deconv2d.2} parent=0 // pred_fallthru
    _
  // Predicated region
  $region10: #{basic_deconv2d.2} parent=0 // pred_check
    _
  $region11: #{basic_deconv2d.2} parent=0 // pred_check_branch
    %16 = sbr.rel (0) target = $region13
  $region12: #{basic_deconv2d.2} parent=0 // pred_region
    _
  $region13: #{basic_deconv2d.2} parent=0 // pred_fallthru
    _
  // Predicated region
  $region14: #{basic_deconv2d.2} parent=0 // pred_check
    _
  $region15: #{basic_deconv2d.2} parent=0 // pred_check_branch
    %18 = sbr.rel (0) target = $region17
  $region16: #{basic_deconv2d.2} parent=0 // pred_region
    _
  $region17: #{basic_deconv2d.2} parent=0 // pred_fallthru
    _
  // Predicated region
  $region18: #{basic_deconv2d.2} parent=0 // pred_check
    _
  $region19: #{basic_deconv2d.2} parent=0 // pred_check_branch
    %20 = sbr.rel (0) target = $region21
  $region20: #{basic_deconv2d.2} parent=0 // pred_region
    _
  $region21: #{basic_deconv2d.2} parent=0 // pred_fallthru
    _
  // Predicated region
  $region22: #{basic_deconv2d.2} parent=0 // pred_check
    _
  $region23: #{basic_deconv2d.2} parent=0 // pred_check_branch
    %22 = sbr.rel (0) target = $region25
  $region24: #{basic_deconv2d.2} parent=0 // pred_region
    _
  $region25: #{basic_deconv2d.2} parent=0 // pred_fallthru
    _
  %v24 = vld [vmem:[%s0] sm:$0xf]
  %v25 = vld [vmem:[%s0 + $0x4] sm:$0xf]
  %v26 = vld [vmem:[%s0 + $0x8] sm:$0xf]
  %v27 = vld [vmem:[%s0 + $0xc] sm:$0xf]
  %v28 = vld [vmem:[%s0 + $0x10] sm:$0xf]
  %v29 = vld [vmem:[%s0 + $0x14] sm:$0xf]
  %v30 = vld [vmem:[%s0 + $0x18] sm:$0xf]
  %v31 = vld [vmem:[%s0 + $0x1c] sm:$0xf]
  %v32 = vld [vmem:[%s0 + $0x20] sm:$0xf]
  %v33 = vld [vmem:[%s0 + $0x24] sm:$0xf]
  %v34 = vld [vmem:[%s0 + $0x28] sm:$0xf]
  %v35 = vld [vmem:[%s0 + $0x2c] sm:$0xf]
  %v36 = vld [vmem:[%s0 + $0x30] sm:$0xf]
  %v37 = vld [vmem:[%s0 + $0x34] sm:$0xf]
  %v38 = vld [vmem:[%s0 + $0x38] sm:$0xf]
  %v39 = vld [vmem:[%s0 + $0x3c] sm:$0xf]
  %v40 = vld [vmem:[%s0 + $0x40] sm:$0xf]
  %v41 = vld [vmem:[%s0 + $0x44] sm:$0xf]
  %v42 = vld [vmem:[%s0 + $0x48] sm:$0xf]
  %v43 = vld [vmem:[%s0 + $0x4c] sm:$0xf]
  %v44 = vld [vmem:[%s0 + $0x50] sm:$0xf]
  %v45 = vld [vmem:[%s0 + $0x54] sm:$0xf]
  %v46 = vld [vmem:[%s1] sm:$0xf]
  %v47 = vld [vmem:[%s1 + $0x4] sm:$0xf]
  %v48 = vld [vmem:[%s1 + $0x8] sm:$0xf]
  %v49 = vld [vmem:[%s1 + $0xc] sm:$0xf]
  %v50 = vld [vmem:[%s1 + $0x10] sm:$0xf]
  %v51 = vld [vmem:[%s1 + $0x14] sm:$0xf]
  %v52 = vld [vmem:[%s1 + $0x18] sm:$0xf]
  %v53 = vld [vmem:[%s1 + $0x1c] sm:$0xf]
  %v76 = vunpack.c.l.b16 %v24
  %v77 = vunpack.c.l.b16 %v25
  %v78 = vunpack.c.l.b16 %v26
  %v79 = vunpack.c.l.b16 %v27
  %v80 = vunpack.c.l.b16 %v28
  %v81 = vunpack.c.l.b16 %v29
  %v82 = vunpack.c.l.b16 %v30
  %v83 = vunpack.c.l.b16 %v31
  %v84 = vunpack.c.l.b16 %v32
  %v85 = vunpack.c.l.b16 %v33
  %v86 = vunpack.c.l.b16 %v34
  %v87 = vunpack.c.l.b16 %v35
  %v88 = vunpack.c.l.b16 %v36
  %v89 = vunpack.c.l.b16 %v37
  %v90 = vunpack.c.l.b16 %v38
  %v91 = vunpack.c.l.b16 %v39
  %v92 = vunpack.c.l.b16 %v40
  %v93 = vunpack.c.l.b16 %v41
  %v94 = vunpack.c.l.b16 %v42
  %v95 = vunpack.c.l.b16 %v43
  %v96 = vunpack.c.l.b16 %v44
  %v97 = vunpack.c.l.b16 %v45
  %v98 = vpack.c.b16 %v77, %v76
  %v99 = vpack.c.b16 %v79, %v78
  %v100 = vpack.c.b16 %v81, %v80
  %v101 = vpack.c.b16 %v83, %v82
  %v102 = vpack.c.b16 %v85, %v84
  %v103 = vpack.c.b16 %v87, %v86
  %v104 = vpack.c.b16 %v89, %v88
  %v105 = vpack.c.b16 %v91, %v90
  %v106 = vpack.c.b16 %v93, %v92
  %v107 = vpack.c.b16 %v95, %v94
  %v108 = vpack.c.b16 %v97, %v96
  %v117 = vunpack.c.l.b16 %v46
  %v118 = vunpack.c.l.b16 %v47
  %v119 = vunpack.c.l.b16 %v48
  %v120 = vunpack.c.l.b16 %v49
  %v121 = vunpack.c.l.b16 %v50
  %v122 = vunpack.c.l.b16 %v51
  %v123 = vunpack.c.l.b16 %v52
  %v124 = vunpack.c.l.b16 %v53
  %v125 = vpack.c.b16 %v118, %v117
  %v126 = vpack.c.b16 %v120, %v119
  %v127 = vpack.c.b16 %v122, %v121
  %v128 = vpack.c.b16 %v124, %v123
  %vm133 = vcmask 523264
  %v135 = vsel %vm133, %v98, 0
  %v138 = vsel %vm133, %v99, 0
  %v141 = vsel %vm133, %v100, 0
  %v144 = vsel %vm133, %v101, 0
  %v147 = vsel %vm133, %v102, 0
  %v150 = vsel %vm133, %v103, 0
  %v153 = vsel %vm133, %v104, 0
  %v156 = vsel %vm133, %v105, 0
  %v159 = vsel %vm133, %v106, 0
  %v162 = vsel %vm133, %v107, 0
  %v165 = vsel %vm133, %v108, 0
  %167 = vmatpush.bf16.msra.mxu0 0
  %168 = vmatpush.bf16.msra.mxu0 0
  %169 = vmatpush.bf16.msra.mxu0 0
  %170 = vmatpush.bf16.msra.mxu0 0
  %171 = vmatpush.bf16.msra.mxu0 %v128
  %172 = vmatpush.bf16.msra.mxu0 %v127
  %173 = vmatpush.bf16.msra.mxu0 %v126
  %174 = vmatpush.bf16.msra.mxu0 %v125
  %175 = vmatmul.bf16.gmra.mxu0 %v135
  %v176 = vpop.f32.mrf.mxu0
  %v177 = vadd.f32 0.0, %v176
  %v178 = vpop.f32.mrf.mxu0
  %v179 = vadd.f32 0.0, %v178
  %180 = vmatmul.bf16.gmra.mxu0 %v138
  %v181 = vpop.f32.mrf.mxu0
  %v182 = vadd.f32 0.0, %v181
  %v183 = vpop.f32.mrf.mxu0
  %v184 = vadd.f32 0.0, %v183
  %185 = vmatmul.bf16.gmra.mxu0 %v141
  %v186 = vpop.f32.mrf.mxu0
  %v187 = vadd.f32 0.0, %v186
  %v188 = vpop.f32.mrf.mxu0
  %v189 = vadd.f32 0.0, %v188
  %190 = vmatmul.bf16.gmra.mxu0 %v144
  %v191 = vpop.f32.mrf.mxu0
  %v192 = vadd.f32 0.0, %v191
  %v193 = vpop.f32.mrf.mxu0
  %v194 = vadd.f32 0.0, %v193
  %195 = vmatmul.bf16.gmra.mxu0 %v147
  %v196 = vpop.f32.mrf.mxu0
  %v197 = vadd.f32 0.0, %v196
  %v198 = vpop.f32.mrf.mxu0
  %v199 = vadd.f32 0.0, %v198
  %200 = vmatmul.bf16.gmra.mxu0 %v150
  %v201 = vpop.f32.mrf.mxu0
  %v202 = vadd.f32 0.0, %v201
  %v203 = vpop.f32.mrf.mxu0
  %v204 = vadd.f32 0.0, %v203
  %205 = vmatmul.bf16.gmra.mxu0 %v153
  %v206 = vpop.f32.mrf.mxu0
  %v207 = vadd.f32 0.0, %v206
  %v208 = vpop.f32.mrf.mxu0
  %v209 = vadd.f32 0.0, %v208
  %210 = vmatmul.bf16.gmra.mxu0 %v156
  %v211 = vpop.f32.mrf.mxu0
  %v212 = vadd.f32 0.0, %v211
  %v213 = vpop.f32.mrf.mxu0
  %v214 = vadd.f32 0.0, %v213
  %215 = vmatmul.bf16.gmra.mxu0 %v159
  %v216 = vpop.f32.mrf.mxu0
  %v217 = vadd.f32 0.0, %v216
  %v218 = vpop.f32.mrf.mxu0
  %v219 = vadd.f32 0.0, %v218
  %220 = vmatmul.bf16.gmra.mxu0 %v162
  %v221 = vpop.f32.mrf.mxu0
  %v222 = vadd.f32 0.0, %v221
  %v223 = vpop.f32.mrf.mxu0
  %v224 = vadd.f32 0.0, %v223
  %225 = vmatmul.bf16.gmra.mxu0 %v165
  %v226 = vpop.f32.mrf.mxu0
  %v227 = vadd.f32 0.0, %v226
  %v228 = vpop.f32.mrf.mxu0
  %v229 = vadd.f32 0.0, %v228
  %230 = vdwg.mxu0
  %v231 = vld [vmem:[%s2] sm:$0xff]
  %v232 = vld [vmem:[%s2 + $0x8] sm:$0xff]
  %v233 = vld [vmem:[%s2 + $0x10] sm:$0xff]
  %v234 = vld [vmem:[%s2 + $0x18] sm:$0xff]
  %v235 = vld [vmem:[%s2 + $0x20] sm:$0xff]
  %v236 = vld [vmem:[%s2 + $0x28] sm:$0xff]
  %v237 = vld [vmem:[%s2 + $0x30] sm:$0xff]
  %v238 = vld [vmem:[%s2 + $0x38] sm:$0xff]
  %v239 = vld [vmem:[%s2 + $0x40] sm:$0xff]
  %v240 = vld [vmem:[%s2 + $0x48] sm:$0xff]
  %v241 = vld [vmem:[%s2 + $0x50] sm:$0xff]
  %v242 = vld [vmem:[%s2 + $0x58] sm:$0xff]
  %v243 = vld [vmem:[%s2 + $0x60] sm:$0xff]
  %v244 = vld [vmem:[%s2 + $0x68] sm:$0xff]
  %v245 = vld [vmem:[%s2 + $0x70] sm:$0xff]
  %v246 = vld [vmem:[%s2 + $0x78] sm:$0xff]
  %v247 = vld [vmem:[%s2 + $0x80] sm:$0xff]
  %v248 = vld [vmem:[%s2 + $0x88] sm:$0xff]
  %v249 = vld [vmem:[%s2 + $0x90] sm:$0xff]
  %v250 = vld [vmem:[%s2 + $0x98] sm:$0xff]
  %v251 = vld [vmem:[%s2 + $0xa0] sm:$0xff]
  %v252 = vld [vmem:[%s2 + $0xa8] sm:$0xff]
  %v253 = vld [vmem:[%s4] sm:$0x1]
  %254 = vset.pattern.permute.xlu0 0
  %255 = vperm.xlu0 %254, %v231
  %v256 = vpop.permute.xlu0 %255
  %257 = vset.pattern.permute.xlu0 0
  %258 = vperm.xlu0 %257, %v232
  %v259 = vpop.permute.xlu0 %258
  %260 = vset.pattern.permute.xlu0 0
  %261 = vperm.xlu0 %260, %v233
  %v262 = vpop.permute.xlu0 %261
  %263 = vset.pattern.permute.xlu0 0
  %264 = vperm.xlu0 %263, %v234
  %v265 = vpop.permute.xlu0 %264
  %266 = vset.pattern.permute.xlu0 0
  %267 = vperm.xlu0 %266, %v235
  %v268 = vpop.permute.xlu0 %267
  %269 = vset.pattern.permute.xlu0 0
  %270 = vperm.xlu0 %269, %v236
  %v271 = vpop.permute.xlu0 %270
  %272 = vset.pattern.permute.xlu0 0
  %273 = vperm.xlu0 %272, %v237
  %v274 = vpop.permute.xlu0 %273
  %275 = vset.pattern.permute.xlu0 0
  %276 = vperm.xlu0 %275, %v238
  %v277 = vpop.permute.xlu0 %276
  %278 = vset.pattern.permute.xlu0 0
  %279 = vperm.xlu0 %278, %v239
  %v280 = vpop.permute.xlu0 %279
  %281 = vset.pattern.permute.xlu0 0
  %282 = vperm.xlu0 %281, %v240
  %v283 = vpop.permute.xlu0 %282
  %284 = vset.pattern.permute.xlu0 0
  %285 = vperm.xlu0 %284, %v241
  %v286 = vpop.permute.xlu0 %285
  %287 = vset.pattern.permute.xlu0 0
  %288 = vperm.xlu0 %287, %v242
  %v289 = vpop.permute.xlu0 %288
  %290 = vset.pattern.permute.xlu0 0
  %291 = vperm.xlu0 %290, %v243
  %v292 = vpop.permute.xlu0 %291
  %293 = vset.pattern.permute.xlu0 0
  %294 = vperm.xlu0 %293, %v244
  %v295 = vpop.permute.xlu0 %294
  %296 = vset.pattern.permute.xlu0 0
  %297 = vperm.xlu0 %296, %v245
  %v298 = vpop.permute.xlu0 %297
  %299 = vset.pattern.permute.xlu0 0
  %300 = vperm.xlu0 %299, %v246
  %v301 = vpop.permute.xlu0 %300
  %302 = vset.pattern.permute.xlu0 0
  %303 = vperm.xlu0 %302, %v247
  %v304 = vpop.permute.xlu0 %303
  %305 = vset.pattern.permute.xlu0 0
  %306 = vperm.xlu0 %305, %v248
  %v307 = vpop.permute.xlu0 %306
  %308 = vset.pattern.permute.xlu0 0
  %309 = vperm.xlu0 %308, %v249
  %v310 = vpop.permute.xlu0 %309
  %311 = vset.pattern.permute.xlu0 0
  %312 = vperm.xlu0 %311, %v250
  %v313 = vpop.permute.xlu0 %312
  %314 = vset.pattern.permute.xlu0 0
  %315 = vperm.xlu0 %314, %v251
  %v316 = vpop.permute.xlu0 %315
  %317 = vset.pattern.permute.xlu0 0
  %318 = vperm.xlu0 %317, %v252
  %v319 = vpop.permute.xlu0 %318
  %v320 = vperm.slane %v253, 0
  %v321 = vadd.s32 %v256, %v320
  %v322 = vadd.s32 %v259, %v320
  %v323 = vadd.s32 %v262, %v320
  %v324 = vadd.s32 %v265, %v320
  %v325 = vadd.s32 %v268, %v320
  %v326 = vadd.s32 %v271, %v320
  %v327 = vadd.s32 %v274, %v320
  %v328 = vadd.s32 %v277, %v320
  %v329 = vadd.s32 %v280, %v320
  %v330 = vadd.s32 %v283, %v320
  %v331 = vadd.s32 %v286, %v320
  %v332 = vadd.s32 %v289, %v320
  %v333 = vadd.s32 %v292, %v320
  %v334 = vadd.s32 %v295, %v320
  %v335 = vadd.s32 %v298, %v320
  %v336 = vadd.s32 %v301, %v320
  %v337 = vadd.s32 %v304, %v320
  %v338 = vadd.s32 %v307, %v320
  %v339 = vadd.s32 %v310, %v320
  %v340 = vadd.s32 %v313, %v320
  %v341 = vadd.s32 %v316, %v320
  %v342 = vadd.s32 %v319, %v320
  %v343 = vld [vmem:[%s3] sm:$0xff]
  %v344 = vld [vmem:[%s3 + $0x8] sm:$0xff]
  %v345 = vld [vmem:[%s3 + $0x10] sm:$0xff]
  %v346 = vld [vmem:[%s3 + $0x18] sm:$0xff]
  %v347 = vld [vmem:[%s3 + $0x20] sm:$0xff]
  %v348 = vld [vmem:[%s3 + $0x28] sm:$0xff]
  %v349 = vld [vmem:[%s3 + $0x30] sm:$0xff]
  %v350 = vld [vmem:[%s3 + $0x38] sm:$0xff]
  %v351 = vld [vmem:[%s3 + $0x40] sm:$0xff]
  %v352 = vld [vmem:[%s3 + $0x48] sm:$0xff]
  %v353 = vld [vmem:[%s3 + $0x50] sm:$0xff]
  %v354 = vld [vmem:[%s3 + $0x58] sm:$0xff]
  %v355 = vld [vmem:[%s3 + $0x60] sm:$0xff]
  %v356 = vld [vmem:[%s3 + $0x68] sm:$0xff]
  %v357 = vld [vmem:[%s3 + $0x70] sm:$0xff]
  %v358 = vld [vmem:[%s3 + $0x78] sm:$0xff]
  %v359 = vld [vmem:[%s3 + $0x80] sm:$0xff]
  %v360 = vld [vmem:[%s3 + $0x88] sm:$0xff]
  %v361 = vld [vmem:[%s3 + $0x90] sm:$0xff]
  %v362 = vld [vmem:[%s3 + $0x98] sm:$0xff]
  %v363 = vld [vmem:[%s3 + $0xa0] sm:$0xff]
  %v364 = vld [vmem:[%s3 + $0xa8] sm:$0xff]
  %v365 = vld [vmem:[%s5] sm:$0x1]
  %366 = vset.pattern.permute.xlu0 0
  %367 = vperm.xlu0 %366, %v343
  %v368 = vpop.permute.xlu0 %367
  %369 = vset.pattern.permute.xlu0 0
  %370 = vperm.xlu0 %369, %v344
  %v371 = vpop.permute.xlu0 %370
  %372 = vset.pattern.permute.xlu0 0
  %373 = vperm.xlu0 %372, %v345
  %v374 = vpop.permute.xlu0 %373
  %375 = vset.pattern.permute.xlu0 0
  %376 = vperm.xlu0 %375, %v346
  %v377 = vpop.permute.xlu0 %376
  %378 = vset.pattern.permute.xlu0 0
  %379 = vperm.xlu0 %378, %v347
  %v380 = vpop.permute.xlu0 %379
  %381 = vset.pattern.permute.xlu0 0
  %382 = vperm.xlu0 %381, %v348
  %v383 = vpop.permute.xlu0 %382
  %384 = vset.pattern.permute.xlu0 0
  %385 = vperm.xlu0 %384, %v349
  %v386 = vpop.permute.xlu0 %385
  %387 = vset.pattern.permute.xlu0 0
  %388 = vperm.xlu0 %387, %v350
  %v389 = vpop.permute.xlu0 %388
  %390 = vset.pattern.permute.xlu0 0
  %391 = vperm.xlu0 %390, %v351
  %v392 = vpop.permute.xlu0 %391
  %393 = vset.pattern.permute.xlu0 0
  %394 = vperm.xlu0 %393, %v352
  %v395 = vpop.permute.xlu0 %394
  %396 = vset.pattern.permute.xlu0 0
  %397 = vperm.xlu0 %396, %v353
  %v398 = vpop.permute.xlu0 %397
  %399 = vset.pattern.permute.xlu0 0
  %400 = vperm.xlu0 %399, %v354
  %v401 = vpop.permute.xlu0 %400
  %402 = vset.pattern.permute.xlu0 0
  %403 = vperm.xlu0 %402, %v355
  %v404 = vpop.permute.xlu0 %403
  %405 = vset.pattern.permute.xlu0 0
  %406 = vperm.xlu0 %405, %v356
  %v407 = vpop.permute.xlu0 %406
  %408 = vset.pattern.permute.xlu0 0
  %409 = vperm.xlu0 %408, %v357
  %v410 = vpop.permute.xlu0 %409
  %411 = vset.pattern.permute.xlu0 0
  %412 = vperm.xlu0 %411, %v358
  %v413 = vpop.permute.xlu0 %412
  %414 = vset.pattern.permute.xlu0 0
  %415 = vperm.xlu0 %414, %v359
  %v416 = vpop.permute.xlu0 %415
  %417 = vset.pattern.permute.xlu0 0
  %418 = vperm.xlu0 %417, %v360
  %v419 = vpop.permute.xlu0 %418
  %420 = vset.pattern.permute.xlu0 0
  %421 = vperm.xlu0 %420, %v361
  %v422 = vpop.permute.xlu0 %421
  %423 = vset.pattern.permute.xlu0 0
  %424 = vperm.xlu0 %423, %v362
  %v425 = vpop.permute.xlu0 %424
  %426 = vset.pattern.permute.xlu0 0
  %427 = vperm.xlu0 %426, %v363
  %v428 = vpop.permute.xlu0 %427
  %429 = vset.pattern.permute.xlu0 0
  %430 = vperm.xlu0 %429, %v364
  %v431 = vpop.permute.xlu0 %430
  %v432 = vperm.slane %v365, 0
  %v433 = vadd.s32 %v368, %v432
  %v434 = vadd.s32 %v371, %v432
  %v435 = vadd.s32 %v374, %v432
  %v436 = vadd.s32 %v377, %v432
  %v437 = vadd.s32 %v380, %v432
  %v438 = vadd.s32 %v383, %v432
  %v439 = vadd.s32 %v386, %v432
  %v440 = vadd.s32 %v389, %v432
  %v441 = vadd.s32 %v392, %v432
  %v442 = vadd.s32 %v395, %v432
  %v443 = vadd.s32 %v398, %v432
  %v444 = vadd.s32 %v401, %v432
  %v445 = vadd.s32 %v404, %v432
  %v446 = vadd.s32 %v407, %v432
  %v447 = vadd.s32 %v410, %v432
  %v448 = vadd.s32 %v413, %v432
  %v449 = vadd.s32 %v416, %v432
  %v450 = vadd.s32 %v419, %v432
  %v451 = vadd.s32 %v422, %v432
  %v452 = vadd.s32 %v425, %v432
  %v453 = vadd.s32 %v428, %v432
  %v454 = vadd.s32 %v431, %v432
  %v455 = vadd.s32 %v321, 2147483648
  %vm457 = vcmp.lt.s32.totalorder %v455, 2147483680
  %v458 = vadd.s32 %v322, 2147483648
  %vm460 = vcmp.lt.s32.totalorder %v458, 2147483680
  %v461 = vadd.s32 %v323, 2147483648
  %vm463 = vcmp.lt.s32.totalorder %v461, 2147483680
  %v464 = vadd.s32 %v324, 2147483648
  %vm466 = vcmp.lt.s32.totalorder %v464, 2147483680
  %v467 = vadd.s32 %v325, 2147483648
  %vm469 = vcmp.lt.s32.totalorder %v467, 2147483680
  %v470 = vadd.s32 %v326, 2147483648
  %vm472 = vcmp.lt.s32.totalorder %v470, 2147483680
  %v473 = vadd.s32 %v327, 2147483648
  %vm475 = vcmp.lt.s32.totalorder %v473, 2147483680
  %v476 = vadd.s32 %v328, 2147483648
  %vm478 = vcmp.lt.s32.totalorder %v476, 2147483680
  %v479 = vadd.s32 %v329, 2147483648
  %vm481 = vcmp.lt.s32.totalorder %v479, 2147483680
  %v482 = vadd.s32 %v330, 2147483648
  %vm484 = vcmp.lt.s32.totalorder %v482, 2147483680
  %v485 = vadd.s32 %v331, 2147483648
  %vm487 = vcmp.lt.s32.totalorder %v485, 2147483680
  %v488 = vadd.s32 %v332, 2147483648
  %vm490 = vcmp.lt.s32.totalorder %v488, 2147483680
  %v491 = vadd.s32 %v333, 2147483648
  %vm493 = vcmp.lt.s32.totalorder %v491, 2147483680
  %v494 = vadd.s32 %v334, 2147483648
  %vm496 = vcmp.lt.s32.totalorder %v494, 2147483680
  %v497 = vadd.s32 %v335, 2147483648
  %vm499 = vcmp.lt.s32.totalorder %v497, 2147483680
  %v500 = vadd.s32 %v336, 2147483648
  %vm502 = vcmp.lt.s32.totalorder %v500, 2147483680
  %v503 = vadd.s32 %v337, 2147483648
  %vm505 = vcmp.lt.s32.totalorder %v503, 2147483680
  %v506 = vadd.s32 %v338, 2147483648
  %vm508 = vcmp.lt.s32.totalorder %v506, 2147483680
  %v509 = vadd.s32 %v339, 2147483648
  %vm511 = vcmp.lt.s32.totalorder %v509, 2147483680
  %v512 = vadd.s32 %v340, 2147483648
  %vm514 = vcmp.lt.s32.totalorder %v512, 2147483680
  %v515 = vadd.s32 %v341, 2147483648
  %vm517 = vcmp.lt.s32.totalorder %v515, 2147483680
  %v518 = vadd.s32 %v342, 2147483648
  %vm520 = vcmp.lt.s32.totalorder %v518, 2147483680
  %v521 = vadd.s32 %v433, 2147483648
  %vm523 = vcmp.lt.s32.totalorder %v521, 2147483680
  %v524 = vadd.s32 %v434, 2147483648
  %vm526 = vcmp.lt.s32.totalorder %v524, 2147483680
  %v527 = vadd.s32 %v435, 2147483648
  %vm529 = vcmp.lt.s32.totalorder %v527, 2147483680
  %v530 = vadd.s32 %v436, 2147483648
  %vm532 = vcmp.lt.s32.totalorder %v530, 2147483680
  %v533 = vadd.s32 %v437, 2147483648
  %vm535 = vcmp.lt.s32.totalorder %v533, 2147483680
  %v536 = vadd.s32 %v438, 2147483648
  %vm538 = vcmp.lt.s32.totalorder %v536, 2147483680
  %v539 = vadd.s32 %v439, 2147483648
  %vm541 = vcmp.lt.s32.totalorder %v539, 2147483680
  %v542 = vadd.s32 %v440, 2147483648
  %vm544 = vcmp.lt.s32.totalorder %v542, 2147483680
  %v545 = vadd.s32 %v441, 2147483648
  %vm547 = vcmp.lt.s32.totalorder %v545, 2147483680
  %v548 = vadd.s32 %v442, 2147483648
  %vm550 = vcmp.lt.s32.totalorder %v548, 2147483680
  %v551 = vadd.s32 %v443, 2147483648
  %vm553 = vcmp.lt.s32.totalorder %v551, 2147483680
  %v554 = vadd.s32 %v444, 2147483648
  %vm556 = vcmp.lt.s32.totalorder %v554, 2147483680
  %v557 = vadd.s32 %v445, 2147483648
  %vm559 = vcmp.lt.s32.totalorder %v557, 2147483680
  %v560 = vadd.s32 %v446, 2147483648
  %vm562 = vcmp.lt.s32.totalorder %v560, 2147483680
  %v563 = vadd.s32 %v447, 2147483648
  %vm565 = vcmp.lt.s32.totalorder %v563, 2147483680
  %v566 = vadd.s32 %v448, 2147483648
  %vm568 = vcmp.lt.s32.totalorder %v566, 2147483680
  %v569 = vadd.s32 %v449, 2147483648
  %vm571 = vcmp.lt.s32.totalorder %v569, 2147483680
  %v572 = vadd.s32 %v450, 2147483648
  %vm574 = vcmp.lt.s32.totalorder %v572, 2147483680
  %v575 = vadd.s32 %v451, 2147483648
  %vm577 = vcmp.lt.s32.totalorder %v575, 2147483680
  %v578 = vadd.s32 %v452, 2147483648
  %vm580 = vcmp.lt.s32.totalorder %v578, 2147483680
  %v581 = vadd.s32 %v453, 2147483648
  %vm583 = vcmp.lt.s32.totalorder %v581, 2147483680
  %v584 = vadd.s32 %v454, 2147483648
  %vm586 = vcmp.lt.s32.totalorder %v584, 2147483680
  %vm587 = vmand %vm457, %vm523
  %vm588 = vmand %vm460, %vm526
  %vm589 = vmand %vm463, %vm529
  %vm590 = vmand %vm466, %vm532
  %vm591 = vmand %vm469, %vm535
  %vm592 = vmand %vm472, %vm538
  %vm593 = vmand %vm475, %vm541
  %vm594 = vmand %vm478, %vm544
  %vm595 = vmand %vm481, %vm547
  %vm596 = vmand %vm484, %vm550
  %vm597 = vmand %vm487, %vm553
  %vm598 = vmand %vm490, %vm556
  %vm599 = vmand %vm493, %vm559
  %vm600 = vmand %vm496, %vm562
  %vm601 = vmand %vm499, %vm565
  %vm602 = vmand %vm502, %vm568
  %vm603 = vmand %vm505, %vm571
  %vm604 = vmand %vm508, %vm574
  %vm605 = vmand %vm511, %vm577
  %vm606 = vmand %vm514, %vm580
  %vm607 = vmand %vm517, %vm583
  %vm608 = vmand %vm520, %vm586
  %v609 = vsel %vm587, %v177, 0.0
  %v610 = vsel %vm588, %v179, 0.0
  %v611 = vsel %vm589, %v182, 0.0
  %v612 = vsel %vm590, %v184, 0.0
  %v613 = vsel %vm591, %v187, 0.0
  %v614 = vsel %vm592, %v189, 0.0
  %v615 = vsel %vm593, %v192, 0.0
  %v616 = vsel %vm594, %v194, 0.0
  %v617 = vsel %vm595, %v197, 0.0
  %v618 = vsel %vm596, %v199, 0.0
  %v619 = vsel %vm597, %v202, 0.0
  %v620 = vsel %vm598, %v204, 0.0
  %v621 = vsel %vm599, %v207, 0.0
  %v622 = vsel %vm600, %v209, 0.0
  %v623 = vsel %vm601, %v212, 0.0
  %v624 = vsel %vm602, %v214, 0.0
  %v625 = vsel %vm603, %v217, 0.0
  %v626 = vsel %vm604, %v219, 0.0
  %v627 = vsel %vm605, %v222, 0.0
  %v628 = vsel %vm606, %v224, 0.0
  %v629 = vsel %vm607, %v227, 0.0
  %v630 = vsel %vm608, %v229, 0.0
  %v631 = vadd.f32 %v609, %v610
  %v632 = vadd.f32 %v631, %v611
  %v633 = vadd.f32 %v632, %v612
  %v634 = vadd.f32 %v633, %v613
  %v635 = vadd.f32 %v634, %v614
  %v636 = vadd.f32 %v635, %v615
  %v637 = vadd.f32 %v636, %v616
  %v638 = vadd.f32 %v637, %v617
  %v639 = vadd.f32 %v638, %v618
  %v640 = vadd.f32 %v639, %v619
  %v641 = vadd.f32 %v640, %v620
  %v642 = vadd.f32 %v641, %v621
  %v643 = vadd.f32 %v642, %v622
  %v644 = vadd.f32 %v643, %v623
  %v645 = vadd.f32 %v644, %v624
  %v646 = vadd.f32 %v645, %v625
  %v647 = vadd.f32 %v646, %v626
  %v648 = vadd.f32 %v647, %v627
  %v649 = vadd.f32 %v648, %v628
  %v650 = vadd.f32 %v649, %v629
  %v651 = vadd.f32 %v650, %v630
  %v652 = vrot.slane %v651, 4
  %v653 = vadd.f32 %v651, %v652
  %v654 = vrot.slane %v653, 2
  %v655 = vadd.f32 %v653, %v654
  %v656 = vrot.slane %v655, 1
  %v657 = vadd.f32 %v655, %v656
  %658 = vst [vmem:[%s6] sm:$0x1] %v657
  %v659 = vmul.f32 %v609, %v609
  %v660 = vmul.f32 %v610, %v610
  %v661 = vmul.f32 %v611, %v611
  %v662 = vmul.f32 %v612, %v612
  %v663 = vmul.f32 %v613, %v613
  %v664 = vmul.f32 %v614, %v614
  %v665 = vmul.f32 %v615, %v615
  %v666 = vmul.f32 %v616, %v616
  %v667 = vmul.f32 %v617, %v617
  %v668 = vmul.f32 %v618, %v618
  %v669 = vmul.f32 %v619, %v619
  %v670 = vmul.f32 %v620, %v620
  %v671 = vmul.f32 %v621, %v621
  %v672 = vmul.f32 %v622, %v622
  %v673 = vmul.f32 %v623, %v623
  %v674 = vmul.f32 %v624, %v624
  %v675 = vmul.f32 %v625, %v625
  %v676 = vmul.f32 %v626, %v626
  %v677 = vmul.f32 %v627, %v627
  %v678 = vmul.f32 %v628, %v628
  %v679 = vmul.f32 %v629, %v629
  %v680 = vmul.f32 %v630, %v630
  %v681 = vadd.f32 %v659, %v660
  %v682 = vadd.f32 %v681, %v661
  %v683 = vadd.f32 %v682, %v662
  %v684 = vadd.f32 %v683, %v663
  %v685 = vadd.f32 %v684, %v664
  %v686 = vadd.f32 %v685, %v665
  %v687 = vadd.f32 %v686, %v666
  %v688 = vadd.f32 %v687, %v667
  %v689 = vadd.f32 %v688, %v668
  %v690 = vadd.f32 %v689, %v669
  %v691 = vadd.f32 %v690, %v670
  %v692 = vadd.f32 %v691, %v671
  %v693 = vadd.f32 %v692, %v672
  %v694 = vadd.f32 %v693, %v673
  %v695 = vadd.f32 %v694, %v674
  %v696 = vadd.f32 %v695, %v675
  %v697 = vadd.f32 %v696, %v676
  %v698 = vadd.f32 %v697, %v677
  %v699 = vadd.f32 %v698, %v678
  %v700 = vadd.f32 %v699, %v679
  %v701 = vadd.f32 %v700, %v680
  %v702 = vrot.slane %v701, 4
  %v703 = vadd.f32 %v701, %v702
  %v704 = vrot.slane %v703, 2
  %v705 = vadd.f32 %v703, %v704
  %v706 = vrot.slane %v705, 1
  %v707 = vadd.f32 %v705, %v706
  %708 = vst [vmem:[%s6 + $0x1] sm:$0x1] %v707
  // Predicated region
  $region26: #{basic_deconv2d.2} parent=0 // pred_check
    _
  $region27: #{basic_deconv2d.2} parent=0 // pred_check_branch
    %710 = sbr.rel (0) target = $region29
  $region28: #{basic_deconv2d.2} parent=0 // pred_region
    _
  $region29: #{basic_deconv2d.2} parent=0 // pred_fallthru
    _
  // Predicated region
  $region30: #{basic_deconv2d.2} parent=0 // pred_check
    _
  $region31: #{basic_deconv2d.2} parent=0 // pred_check_branch
    %712 = sbr.rel (0) target = $region33
  $region32: #{basic_deconv2d.2} parent=0 // pred_region
    _
  $region33: #{basic_deconv2d.2} parent=0 // pred_fallthru
    _

</llo_original>
